<compile_context>
chip_gen: v7x
topology: tpu7x:2x2x1
jax: 0.10.0
libtpu: 0.0.40
codegen_flags: <defaults>
</compile_context>

<pallas_src>
import math
import functools

import jax
import jax.numpy as jnp
from jax.experimental import pallas as pl
from jax.experimental.pallas import tpu as pltpu


def B(rho):
    return 0.0 if rho == 1 else (math.sqrt(1 - (rho - 1) ** 2) - 1) / (rho - 1)


def _round_up(x, m):
    return ((x + m - 1) // m) * m


def _device_vmem_limit_bytes():
    """Per-generation scoped-VMEM limit to request from Mosaic."""
    try:
        kind = jax.devices()[0].device_kind.lower()
    except Exception:
        kind = ""
    if "v7" in kind:
        return kind, 48 * 1024 * 1024      # v7x: 64 MiB physical per TC
    if "v5" in kind or "v6" in kind:
        return kind, 100 * 1024 * 1024     # v5e/v6e: 128 MiB physical
    return kind, 64 * 1024 * 1024          # unknown generation: stay modest


# ----------------------------- fused Pallas kernel ------------------------------ #
def _fused_mlp_kernel(*refs, n_weights, b, compute_dtype, fold_scale):
    """Whole MTDenseNet forward for one batch tile.

    refs = (scale_ref, x_ref, w0_ref, ..., w{n-1}_ref, o_ref)

      scale_ref : SMEM (1,) f32            per-task scale (already s**L if fold_scale)
      x_ref     : VMEM [TB, in_pad] f32    batch tile of inputs
      wi_ref    : VMEM [in_pad_i, out_pad_i]  (transposed + zero-padded torch W)
      o_ref     : VMEM [TB, out_pad] f32   lane-dense padded readout output
    """
    scale_ref = refs[0]
    x_ref = refs[1]
    w_refs = refs[2:2 + n_weights]
    o_ref = refs[2 + n_weights]

    # Read the SMEM scalar once, up front.
    s = scale_ref[0]

    h = x_ref[...].astype(compute_dtype)
    y = None
    # Python loop -> unrolled at trace time; activations stay in VMEM/vregs.
    for i, w_ref in enumerate(w_refs):
        y = jnp.dot(h, w_ref[...], preferred_element_type=jnp.float32)
        if not fold_scale:
            # per-layer scale (needed for non-positive weight_scaling[task])
            y = y * s
        if i < n_weights - 1:
            # ABReLU(y) = b*min(y,0) + max(y,0)  ==  where(y > 0, y, b*y)
            y = jnp.where(y > 0, y, b * y)
            h = y.astype(compute_dtype)
    if fold_scale:
        # ABReLU is positively homogeneous -> fold all L scale multiplies into
        # a single multiply of the final (small) readout tile by s**L.
        y = y * s
    o_ref[...] = y.astype(o_ref.dtype)


# ------------------------------ model wrapper ------------------------------ #
class MTDenseNetPallas:
    """MTDenseNet (bias=False, piecewise_linear) with a fully fused Pallas forward.

    Weights are transposed ([in, out]), zero-padded to 128-lane multiples and
    cast to `compute_dtype` ONCE here; forward calls only pad the batch of x.
    """

    def __init__(self, weights_t, readout_w_t, weight_scaling, b,
                 *, compute_dtype=jnp.bfloat16):
        all_w = [jnp.asarray(w) for w in list(weights_t) + [readout_w_t]]
        assert len(all_w) >= 1, "model must have at least the readout layer"
        self.b = float(b)
        self.compute_dtype = compute_dtype
        self.weight_scaling = [float(s) for s in weight_scaling]

        dims = [all_w[0].shape[0]] + [w.shape[1] for w in all_w]
        pdims = [_round_up(d, 128) for d in dims]
        self.inp_dim, self.outp_dim = dims[0], dims[-1]
        self.in_pad, self.out_pad = pdims[0], pdims[-1]
        self.max_pad = max(pdims)

        w_padded = []
        for w, din, dout, pin, pout in zip(all_w, dims[:-1], dims[1:],
                                           pdims[:-1], pdims[1:]):
            wp = jnp.zeros((pin, pout), compute_dtype)
            wp = wp.at[:din, :dout].set(w.astype(compute_dtype))
            w_padded.append(wp)
        self.w_padded = w_padded
        self.n_weights = len(w_padded)

        self._kind, self._vmem_limit = _device_vmem_limit_bytes()
        self._w_vmem_bytes = (sum(int(w.size) for w in w_padded)
                              * jnp.dtype(compute_dtype).itemsize)

    # ---- VMEM estimate (weights single-buffered; x/out double-buffered) ----
    def _vmem_estimate(self, tile):
        xbytes = 2 * tile * self.in_pad * 4
        obytes = 2 * tile * self.out_pad * 4
        actbytes = 3 * tile * self.max_pad * 4     # f32 activation temporaries
        return self._w_vmem_bytes + xbytes + obytes + actbytes

    def _choose_tile(self, batch, requested):
        sub = 16 if self.compute_dtype == jnp.bfloat16 else 8
        min_pad = _round_up(batch, sub)
        if requested is not None:
            tile = _round_up(max(int(requested), sub), sub)
            tile = min(tile, min_pad)
        else:
            tile = 512                              # MXU-256 aligned default
            if min_pad <= tile:
                tile = min_pad                      # small problem: single grid step
            elif "v7" in self._kind and min_pad >= 2 * 256:
                # keep >= 2 grid steps so both v7x TensorCores get work
                tile = min(tile, _round_up(-(-min_pad // 2), 256))
        budget = int(self._vmem_limit * 0.75)
        while self._vmem_estimate(tile) > budget and tile > sub:
            tile = (tile - 256) if tile > 256 else max(sub, _round_up(tile // 2, sub))
        return max(tile, sub)

    # ---- forward ----
    def __call__(self, x, task, *, batch_tile=None):
        x = jnp.asarray(x, jnp.float32)
        orig_shape = x.shape
        if x.ndim == 1:
            x = x[None, :]
        elif x.ndim > 2:
            x = x.reshape(-1, orig_shape[-1])
        batch = x.shape[0]

        tile = self._choose_tile(batch, batch_tile)
        batch_pad = _round_up(batch, tile)

        if batch_pad == batch and self.in_pad == self.inp_dim:
            xp = x
        else:
            xp = jnp.zeros((batch_pad, self.in_pad), jnp.float32)
            xp = xp.at[:batch, :self.inp_dim].set(x)

        s_val = self.weight_scaling[task]
        fold_scale = s_val > 0.0
        scale_arg = jnp.asarray(
            [s_val ** self.n_weights if fold_scale else s_val], jnp.float32)

        kernel = functools.partial(
            _fused_mlp_kernel, n_weights=self.n_weights, b=self.b,
            compute_dtype=self.compute_dtype, fold_scale=fold_scale)

        def run(single_buffer_weights):
            w_specs = []
            for w in self.w_padded:
                if single_buffer_weights:
                    # grid-invariant weights: one resident VMEM buffer, never re-fetched
                    w_specs.append(pl.BlockSpec(w.shape, lambda i: (0, 0),
                                                pipeline_mode=pl.Buffered(1)))
                else:
                    w_specs.append(pl.BlockSpec(w.shape, lambda i: (0, 0)))
            in_specs = ([pl.BlockSpec(memory_space=pltpu.MemorySpace.SMEM),      # scale
                         pl.BlockSpec((tile, self.in_pad), lambda i: (i, 0))]     # x tile
                        + w_specs)
            return pl.pallas_call(
                kernel,
                out_shape=jax.ShapeDtypeStruct((batch_pad, self.out_pad), jnp.float32),
                grid_spec=pltpu.PrefetchScalarGridSpec(
                    num_scalar_prefetch=0,
                    grid=(batch_pad // tile,),
                    in_specs=in_specs,
                    out_specs=pl.BlockSpec((tile, self.out_pad), lambda i: (i, 0)),
                ),
                compiler_params=pltpu.CompilerParams(
                    dimension_semantics=("parallel",),
                    vmem_limit_bytes=self._vmem_limit),
            )(scale_arg, xp, *self.w_padded)

        try:
            out = run(True)
        except Exception:
            # fallback for environments that reject single-buffer pipeline_mode
            out = run(False)

        out = out[:batch, :self.outp_dim]
        if len(orig_shape) == 1:
            out = out[0]
        elif len(orig_shape) > 2:
            out = out.reshape(*orig_shape[:-1], self.outp_dim)
        return out


# --------------------------- model construction --------------------------- #
def init_mt_densenet(key, inp_dim, hdims, outp_dim, rho, linear_readout=False):
    """Deterministic parameter init matching MTDenseNet.__init__ (piecewise_linear)."""
    b = B(rho)
    weights = []  # transposed: [in, out]
    dims_in = [inp_dim] + hdims[:-1]
    for _in, _out in zip(dims_in, hdims):
        key, sub = jax.random.split(key)
        std = math.sqrt(2.0 / ((b - 1.0) ** 2 * _in))
        w = std * jax.random.normal(sub, (_out, _in), dtype=jnp.float32)  # torch [out, in]
        weights.append(w.T)                                               # kernel [in, out]
    _in_readout = hdims[-1] if len(hdims) > 0 else inp_dim
    key, sub = jax.random.split(key)
    if linear_readout:
        readout = jnp.zeros((outp_dim, _in_readout), dtype=jnp.float32)
    else:
        _out_last = hdims[-1] if len(hdims) > 0 else inp_dim
        std = math.sqrt(2.0 / ((b - 1.0) ** 2 * _out_last))
        readout = std * jax.random.normal(sub, (outp_dim, _in_readout), dtype=jnp.float32)
    return weights, readout.T, b
# TODO(synk): bias=True and nonlinearity='tanh' variants of MTLinear/MTDenseNet
#             (and ModelWithNTK.ntk_features, which needs autograd) are not
#             exercised here (module default path is bias=False, piecewise_linear).


# ------------------------------- reference -------------------------------- #
def reference_forward(x, weights_t, readout_w_t, weight_scaling, task, b):
    s = jnp.asarray(weight_scaling, dtype=jnp.float32)[task]
    h = x
    for w_t in weights_t:
        h = h @ (s * w_t)
        h = b * jnp.minimum(h, 0.0) + jnp.maximum(h, 0.0)
    return h @ (s * readout_w_t)


if __name__ == "__main__":
    # small shapes consistent with the module
    batch, inp_dim = 16, 16
    hdims = [32, 32]
    outp_dim = 1
    rho = 0.5                          # nonzero ABReLU slope b = B(0.5) ≈ 0.2679
    weight_scaling = [1.0, 0.5, -0.5]  # includes a negative scale (non-fold path)

    key = jax.random.PRNGKey(0)
    key, xkey = jax.random.split(key)
    x = jax.random.normal(xkey, (batch, inp_dim), dtype=jnp.float32)

    weights_t, readout_w_t, b = init_mt_densenet(key, inp_dim, hdims, outp_dim, rho)
    ref_t1 = reference_forward(x, weights_t, readout_w_t, weight_scaling, 1, b)
    ref_t2 = reference_forward(x, weights_t, readout_w_t, weight_scaling, 2, b)

    # --- f32 path, tight tolerance; batch_tile=8 exercises a 2-step grid (fold-scale) ---
    model_f32 = MTDenseNetPallas(weights_t, readout_w_t, weight_scaling, b,
                                 compute_dtype=jnp.float32)
    out_f32 = jax.block_until_ready(model_f32(x, 1, batch_tile=8))
    assert out_f32.shape == (batch, outp_dim)
    assert jnp.allclose(out_f32, ref_t1, atol=1e-5, rtol=1e-5), "f32 mismatch vs JAX reference"

    # --- negative per-task scale -> per-layer scale fallback, default single tile ---
    out_neg = jax.block_until_ready(model_f32(x, 2))
    assert jnp.allclose(out_neg, ref_t2, atol=1e-5, rtol=1e-5), "negative-scale mismatch"

    # --- default bf16 weight/activation path (f32 MXU accumulation), loose tolerance ---
    model_bf16 = MTDenseNetPallas(weights_t, readout_w_t, weight_scaling, b)
    out_bf16 = jax.block_until_ready(model_bf16(x, 1))
    assert out_bf16.shape == (batch, outp_dim)
    assert jnp.allclose(out_bf16, ref_t1, atol=5e-2, rtol=5e-2), "bf16 mismatch vs JAX reference"

    print("KERNEL_OK")
</pallas_src>

<mosaic_0001>
module attributes {stable_mosaic.version = 11 : i64} {
  func.func @_fused_mlp_kernel(%arg0: i32, %arg1: memref<1xf32, #tpu.memory_space<smem>>, %arg2: memref<8x128xf32, #tpu.memory_space<vmem>>, %arg3: memref<128x128xf32, #tpu.memory_space<vmem>>, %arg4: memref<128x128xf32, #tpu.memory_space<vmem>>, %arg5: memref<128x128xf32, #tpu.memory_space<vmem>>, %arg6: memref<8x128xf32, #tpu.memory_space<vmem>>) attributes {dimension_semantics = [#tpu.dimension_semantics<parallel>], iteration_bounds = array<i64: 2>, scalar_prefetch = 0 : i64, scratch_operands = 0 : i64, tpu.core_type = #tpu.core_type<tc>, window_params = [{transform_indices = @transform_0, window_bounds = array<i64: 1>}, {transform_indices = @transform_1, window_bounds = array<i64: 8, 128>}, {pipeline_mode = #tpu.pipeline_mode<synchronous>, transform_indices = @transform_2, window_bounds = array<i64: 128, 128>}, {pipeline_mode = #tpu.pipeline_mode<synchronous>, transform_indices = @transform_3, window_bounds = array<i64: 128, 128>}, {pipeline_mode = #tpu.pipeline_mode<synchronous>, transform_indices = @transform_4, window_bounds = array<i64: 128, 128>}, {transform_indices = @transform_5, window_bounds = array<i64: 8, 128>}]} {
    %c0 = arith.constant 0 : index
    %0 = memref.load %arg1[%c0] : memref<1xf32, #tpu.memory_space<smem>>
    %c0_0 = arith.constant 0 : index
    %c0_1 = arith.constant 0 : index
    %1 = vector.load %arg2[%c0_0, %c0_1] : memref<8x128xf32, #tpu.memory_space<vmem>>, vector<8x128xf32>
    %c0_2 = arith.constant 0 : index
    %c0_3 = arith.constant 0 : index
    %2 = vector.load %arg3[%c0_2, %c0_3] : memref<128x128xf32, #tpu.memory_space<vmem>>, vector<128x128xf32>
    %cst = arith.constant dense<0.000000e+00> : vector<8x128xf32>
    %3 = tpu.matmul %1, %2, %cst {dimension_numbers = #tpu.dot_dimension_numbers<[1], [0], [0], [1], [0, 0, 1, 1], [], []>} : vector<8x128xf32>, vector<128x128xf32>, vector<8x128xf32> -> vector<8x128xf32>
    %cst_4 = arith.constant 0.000000e+00 : f32
    %4 = vector.broadcast %cst_4 : f32 to vector<8x128xf32>
    %5 = arith.cmpf ogt, %3, %4 : vector<8x128xf32>
    %cst_5 = arith.constant 0.267949194 : f32
    %6 = vector.broadcast %cst_5 : f32 to vector<8x128xf32>
    %7 = arith.mulf %6, %3 : vector<8x128xf32>
    %8 = arith.select %5, %3, %7 : vector<8x128xi1>, vector<8x128xf32>
    %c0_6 = arith.constant 0 : index
    %c0_7 = arith.constant 0 : index
    %9 = vector.load %arg4[%c0_6, %c0_7] : memref<128x128xf32, #tpu.memory_space<vmem>>, vector<128x128xf32>
    %cst_8 = arith.constant dense<0.000000e+00> : vector<8x128xf32>
    %10 = tpu.matmul %8, %9, %cst_8 {dimension_numbers = #tpu.dot_dimension_numbers<[1], [0], [0], [1], [0, 0, 1, 1], [], []>} : vector<8x128xf32>, vector<128x128xf32>, vector<8x128xf32> -> vector<8x128xf32>
    %cst_9 = arith.constant 0.000000e+00 : f32
    %11 = vector.broadcast %cst_9 : f32 to vector<8x128xf32>
    %12 = arith.cmpf ogt, %10, %11 : vector<8x128xf32>
    %cst_10 = arith.constant 0.267949194 : f32
    %13 = vector.broadcast %cst_10 : f32 to vector<8x128xf32>
    %14 = arith.mulf %13, %10 : vector<8x128xf32>
    %15 = arith.select %12, %10, %14 : vector<8x128xi1>, vector<8x128xf32>
    %c0_11 = arith.constant 0 : index
    %c0_12 = arith.constant 0 : index
    %16 = vector.load %arg5[%c0_11, %c0_12] : memref<128x128xf32, #tpu.memory_space<vmem>>, vector<128x128xf32>
    %cst_13 = arith.constant dense<0.000000e+00> : vector<8x128xf32>
    %17 = tpu.matmul %15, %16, %cst_13 {dimension_numbers = #tpu.dot_dimension_numbers<[1], [0], [0], [1], [0, 0, 1, 1], [], []>} : vector<8x128xf32>, vector<128x128xf32>, vector<8x128xf32> -> vector<8x128xf32>
    %18 = vector.broadcast %0 : f32 to vector<8x128xf32>
    %19 = arith.mulf %17, %18 : vector<8x128xf32>
    %c0_14 = arith.constant 0 : index
    %c0_15 = arith.constant 0 : index
    %20 = vector.load %arg6[%c0_14, %c0_15] : memref<8x128xf32, #tpu.memory_space<vmem>>, vector<8x128xf32>
    tpu.vector_store %arg6[%c0_14, %c0_15], %19 {strides = array<i32>} : memref<8x128xf32, #tpu.memory_space<vmem>>, vector<8x128xf32>,
    return
  }
  func.func @transform_0(%arg0: i32) -> i32 {
    %c0_i32 = arith.constant 0 : i32
    %c0_i32_0 = arith.constant 0 : i32
    return %c0_i32 : i32
  }
  func.func @transform_1(%arg0: i32) -> (i32, i32) {
    %c0_i32 = arith.constant 0 : i32
    %c0_i32_0 = arith.constant 0 : i32
    return %arg0, %c0_i32 : i32, i32
  }
  func.func @transform_2(%arg0: i32) -> (i32, i32) {
    %c0_i32 = arith.constant 0 : i32
    %c0_i32_0 = arith.constant 0 : i32
    %c0_i32_1 = arith.constant 0 : i32
    return %c0_i32, %c0_i32_0 : i32, i32
  }
  func.func @transform_3(%arg0: i32) -> (i32, i32) {
    %c0_i32 = arith.constant 0 : i32
    %c0_i32_0 = arith.constant 0 : i32
    %c0_i32_1 = arith.constant 0 : i32
    return %c0_i32, %c0_i32_0 : i32, i32
  }
  func.func @transform_4(%arg0: i32) -> (i32, i32) {
    %c0_i32 = arith.constant 0 : i32
    %c0_i32_0 = arith.constant 0 : i32
    %c0_i32_1 = arith.constant 0 : i32
    return %c0_i32, %c0_i32_0 : i32, i32
  }
  func.func @transform_5(%arg0: i32) -> (i32, i32) {
    %c0_i32 = arith.constant 0 : i32
    %c0_i32_0 = arith.constant 0 : i32
    return %arg0, %c0_i32 : i32, i32
  }
}

module attributes {stable_mosaic.version = 11 : i64} {
  func.func @_fused_mlp_kernel(%arg0: i32, %arg1: memref<1xf32, #tpu.memory_space<smem>>, %arg2: memref<8x128xf32, #tpu.memory_space<vmem>>, %arg3: memref<128x128xf32, #tpu.memory_space<vmem>>, %arg4: memref<128x128xf32, #tpu.memory_space<vmem>>, %arg5: memref<128x128xf32, #tpu.memory_space<vmem>>, %arg6: memref<8x128xf32, #tpu.memory_space<vmem>>) attributes {dimension_semantics = [#tpu.dimension_semantics<parallel>], iteration_bounds = array<i64: 2>, scalar_prefetch = 0 : i64, scratch_operands = 0 : i64, tpu.core_type = #tpu.core_type<tc>, window_params = [{transform_indices = @transform_0, window_bounds = array<i64: 1>}, {transform_indices = @transform_1, window_bounds = array<i64: 8, 128>}, {pipeline_mode = #tpu.pipeline_mode<synchronous>, transform_indices = @transform_2, window_bounds = array<i64: 128, 128>}, {pipeline_mode = #tpu.pipeline_mode<synchronous>, transform_indices = @transform_3, window_bounds = array<i64: 128, 128>}, {pipeline_mode = #tpu.pipeline_mode<synchronous>, transform_indices = @transform_4, window_bounds = array<i64: 128, 128>}, {transform_indices = @transform_5, window_bounds = array<i64: 8, 128>}]} {
    %c0 = arith.constant 0 : index
    %0 = memref.load %arg1[%c0] : memref<1xf32, #tpu.memory_space<smem>>
    %c0_0 = arith.constant 0 : index
    %c0_1 = arith.constant 0 : index
    %1 = vector.load %arg2[%c0_0, %c0_1] : memref<8x128xf32, #tpu.memory_space<vmem>>, vector<8x128xf32>
    %c0_2 = arith.constant 0 : index
    %c0_3 = arith.constant 0 : index
    %2 = vector.load %arg3[%c0_2, %c0_3] : memref<128x128xf32, #tpu.memory_space<vmem>>, vector<128x128xf32>
    %cst = arith.constant dense<0.000000e+00> : vector<8x128xf32>
    %3 = tpu.matmul %1, %2, %cst {dimension_numbers = #tpu.dot_dimension_numbers<[1], [0], [0], [1], [0, 0, 1, 1], [], []>} : vector<8x128xf32>, vector<128x128xf32>, vector<8x128xf32> -> vector<8x128xf32>
    %cst_4 = arith.constant 0.000000e+00 : f32
    %4 = vector.broadcast %cst_4 : f32 to vector<8x128xf32>
    %5 = arith.cmpf ogt, %3, %4 : vector<8x128xf32>
    %cst_5 = arith.constant 0.267949194 : f32
    %6 = vector.broadcast %cst_5 : f32 to vector<8x128xf32>
    %7 = arith.mulf %6, %3 : vector<8x128xf32>
    %8 = arith.select %5, %3, %7 : vector<8x128xi1>, vector<8x128xf32>
    %c0_6 = arith.constant 0 : index
    %c0_7 = arith.constant 0 : index
    %9 = vector.load %arg4[%c0_6, %c0_7] : memref<128x128xf32, #tpu.memory_space<vmem>>, vector<128x128xf32>
    %cst_8 = arith.constant dense<0.000000e+00> : vector<8x128xf32>
    %10 = tpu.matmul %8, %9, %cst_8 {dimension_numbers = #tpu.dot_dimension_numbers<[1], [0], [0], [1], [0, 0, 1, 1], [], []>} : vector<8x128xf32>, vector<128x128xf32>, vector<8x128xf32> -> vector<8x128xf32>
    %cst_9 = arith.constant 0.000000e+00 : f32
    %11 = vector.broadcast %cst_9 : f32 to vector<8x128xf32>
    %12 = arith.cmpf ogt, %10, %11 : vector<8x128xf32>
    %cst_10 = arith.constant 0.267949194 : f32
    %13 = vector.broadcast %cst_10 : f32 to vector<8x128xf32>
    %14 = arith.mulf %13, %10 : vector<8x128xf32>
    %15 = arith.select %12, %10, %14 : vector<8x128xi1>, vector<8x128xf32>
    %c0_11 = arith.constant 0 : index
    %c0_12 = arith.constant 0 : index
    %16 = vector.load %arg5[%c0_11, %c0_12] : memref<128x128xf32, #tpu.memory_space<vmem>>, vector<128x128xf32>
    %cst_13 = arith.constant dense<0.000000e+00> : vector<8x128xf32>
    %17 = tpu.matmul %15, %16, %cst_13 {dimension_numbers = #tpu.dot_dimension_numbers<[1], [0], [0], [1], [0, 0, 1, 1], [], []>} : vector<8x128xf32>, vector<128x128xf32>, vector<8x128xf32> -> vector<8x128xf32>
    %18 = vector.broadcast %0 : f32 to vector<8x128xf32>
    %19 = arith.mulf %17, %18 : vector<8x128xf32>
    %c0_14 = arith.constant 0 : index
    %c0_15 = arith.constant 0 : index
    %20 = vector.load %arg6[%c0_14, %c0_15] : memref<8x128xf32, #tpu.memory_space<vmem>>, vector<8x128xf32>
    tpu.vector_store %arg6[%c0_14, %c0_15], %19 {strides = array<i32>} : memref<8x128xf32, #tpu.memory_space<vmem>>, vector<8x128xf32>,
    return
  }
  func.func @transform_0(%arg0: i32) -> i32 {
    %c0_i32 = arith.constant 0 : i32
    %c0_i32_0 = arith.constant 0 : i32
    return %c0_i32 : i32
  }
  func.func @transform_1(%arg0: i32) -> (i32, i32) {
    %c0_i32 = arith.constant 0 : i32
    %c0_i32_0 = arith.constant 0 : i32
    return %arg0, %c0_i32 : i32, i32
  }
  func.func @transform_2(%arg0: i32) -> (i32, i32) {
    %c0_i32 = arith.constant 0 : i32
    %c0_i32_0 = arith.constant 0 : i32
    %c0_i32_1 = arith.constant 0 : i32
    return %c0_i32, %c0_i32_0 : i32, i32
  }
  func.func @transform_3(%arg0: i32) -> (i32, i32) {
    %c0_i32 = arith.constant 0 : i32
    %c0_i32_0 = arith.constant 0 : i32
    %c0_i32_1 = arith.constant 0 : i32
    return %c0_i32, %c0_i32_0 : i32, i32
  }
  func.func @transform_4(%arg0: i32) -> (i32, i32) {
    %c0_i32 = arith.constant 0 : i32
    %c0_i32_0 = arith.constant 0 : i32
    %c0_i32_1 = arith.constant 0 : i32
    return %c0_i32, %c0_i32_0 : i32, i32
  }
  func.func @transform_5(%arg0: i32) -> (i32, i32) {
    %c0_i32 = arith.constant 0 : i32
    %c0_i32_0 = arith.constant 0 : i32
    return %arg0, %c0_i32 : i32, i32
  }
}

</mosaic_0001>

<llo_original>
// kernel: tpu_custom_call.1
$region0: #{tpu_custom_call.1}
  #allocation0 [shape = 'u32[]', space=smem, size = 0x4, offset = 0x4, fixed_abs, tag = 'smem constant byte address 0x4 - core index']
  #allocation1 [shape = 'u32[144,128]{1,0:T(1,128)}', space=vmem, size = 0x12000, scoped, tag = 'internal scratch']
  #allocation2 [shape = 'f32[1]{0:T(128)S(6)}', space=smem, size = 0x200, scoped, tag = 'scoped memory for tpu_custom_call.1']
  %s0 = inlined_call_operand.<no memory space> [shape: f32[1], index: 0, kind: input, shape index: {}]
  %s1 = inlined_call_operand.hbm [shape: f32[16,128], index: 1, kind: input, shape index: {}]
  %s2 = inlined_call_operand.hbm [shape: f32[128,128], index: 2, kind: input, shape index: {}]
  %s3 = inlined_call_operand.hbm [shape: f32[128,128], index: 3, kind: input, shape index: {}]
  %s4 = inlined_call_operand.hbm [shape: f32[128,128], index: 4, kind: input, shape index: {}]
  %s5 = inlined_call_operand.hbm [shape: f32[16,128], index: 5, kind: output, shape index: {}]
  %s6 = sld [smem:[#allocation0]]
  $region69: #{tpu_custom_call.1} parent=0
    _
  %s8 = ssub.s32 1, %s6
  %s9 = scalar_select 0, %s8, %s6
  %10 = sst [smem:[#allocation2]] %s0
  $region1: #{tpu_custom_call.1} parent=0
    #allocation3 [shape = 'u8[8192]{0}', space=vmem, size = 0x2000, scoped, tag = 'input window, operand 1']
    #allocation4 [shape = 's32[2]{0}', space=sflag, size = 0x8, scoped, tag = 'scoped memory for tpu_custom_call.1']
    #allocation5 [shape = 's32[2]{0}', space=sflag, size = 0x8, scoped, tag = 'scoped memory for tpu_custom_call.1']
    #allocation6 [shape = 'u8[65536]{0}', space=vmem, size = 0x10000, scoped, tag = 'input window, operand 2, single buffered']
    #allocation7 [shape = 's32[1]{0}', space=sflag, size = 0x4, scoped, tag = 'scoped memory for tpu_custom_call.1']
    #allocation8 [shape = 'u8[65536]{0}', space=vmem, size = 0x10000, scoped, tag = 'input window, operand 3, single buffered']
    #allocation9 [shape = 'u8[65536]{0}', space=vmem, size = 0x10000, scoped, tag = 'input window, operand 4, single buffered']
    #allocation10 [shape = 's32[1]{0}', space=sflag, size = 0x4, scoped, tag = 'scoped memory for tpu_custom_call.1']
    #allocation11 [shape = 'u8[8192]{0}', space=vmem, size = 0x2000, scoped, tag = 'output window, operand 0']
    %11 = vsyncpa [#allocation4], 0
    %s12 = scalar_lea.sflag [#allocation4], 1
    %13 = vsyncpa %s12, 0
    %14 = vsyncpa [#allocation7], 0
    %15 = vsyncpa [#allocation10], 0
    %16 = vsyncpa [#allocation5], 0
    %s17 = scalar_lea.sflag [#allocation5], 1
    %18 = vsyncpa %s17, 0
    loop: start=0, step=1, limit=4
    $region2: #{tpu_custom_call.1} parent=1 // loop_pre_header
      _
    $region3: #{tpu_custom_call.1} parent=1 // loop_header
      %s20 = sphi 0, %s24
      %p21 = scmp.ge.s32.totalorder %s20, 4
      %s28 = sphi 0, %s28
      %s30 = sphi 0, %s28
      %s31 = sphi 0, %s30
      %s45 = sphi 0, %s31
      %s51 = sphi 0, %s53
      %s54 = sphi 0, %s51
      %s55 = sphi 0, %s54
      %s71 = sphi 0, %s55
      %s75 = sphi 0, %s75
      %s77 = sphi 0, %s75
      %s78 = sphi 0, %s77
      %s92 = sphi 0, %s78
      %s96 = sphi 0, %s96
      %s98 = sphi 0, %s96
      %s99 = sphi 0, %s98
      %s113 = sphi 0, %s99
      %s117 = sphi 0, %s117
      %s119 = sphi 0, %s117
      %s120 = sphi 0, %s119
      %s134 = sphi 0, %s120
      %s140 = sphi 0, %s142
      %s143 = sphi 0, %s140
      %s144 = sphi 0, %s143
      %s160 = sphi 0, %s144
    $region4: #{tpu_custom_call.1} parent=1 // loop_header_branch
      %23 = sbr.rel (%p21) target = $region8
    $region5: #{tpu_custom_call.1} parent=1 // loop_body
      %s25 = ssub.s32 %s20, 1
      %s26 = ssub.s32 %s20, 2
      %s27 = sadd.s32 %s20, 1
      %s29 = sadd.s32 %s28, 1
      %p32 = scmp.eq.s32.totalorder %s20, 1
      %p33 = scmp.ne.s32.totalorder %s28, %s30
      %p34 = scmp.eq.s32.totalorder %s20, 0
      %p35 = por %p33, %p34
      %p36 = scmp.ne.s32.totalorder %s28, %s30
      %p37 = scmp.eq.s32.totalorder %s25, 1
      %p38 = por %p36, %p37
      %p39 = scmp.ne.s32.totalorder %s30, %s31
      %p40 = scmp.eq.s32.totalorder %s25, 0
      %p41 = por %p39, %p40
      %p42 = scmp.ne.s32.totalorder %s30, %s31
      %p43 = scmp.eq.s32.totalorder %s26, 1
      %p44 = por %p42, %p43
      %p46 = scmp.ne.s32.totalorder %s31, %s45
      %p47 = scmp.eq.s32.totalorder %s26, 0
      %p48 = por %p46, %p47
      %s49 = ssub.s32 %s20, %s27
      %p50 = scmp.eq.s32.totalorder %s49, 0
      %s52 = sadd.s32 %s51, 1
      %s53 = scalar_select %p50, %s51, %s52
      %p56 = pneg %p50
      %p57 = scmp.eq.s32.totalorder %s20, 1
      %p58 = por %p56, %p57
      %p59 = scmp.ne.s32.totalorder %s51, %s54
      %p60 = scmp.eq.s32.totalorder %s20, 0
      %p61 = por %p59, %p60
      %p62 = scmp.ne.s32.totalorder %s51, %s54
      %p63 = scmp.eq.s32.totalorder %s25, 1
      %p64 = por %p62, %p63
      %p65 = scmp.ne.s32.totalorder %s54, %s55
      %p66 = scmp.eq.s32.totalorder %s25, 0
      %p67 = por %p65, %p66
      %p68 = scmp.ne.s32.totalorder %s54, %s55
      %p69 = scmp.eq.s32.totalorder %s26, 1
      %p70 = por %p68, %p69
      %p72 = scmp.ne.s32.totalorder %s55, %s71
      %p73 = scmp.eq.s32.totalorder %s26, 0
      %p74 = por %p72, %p73
      %s76 = sadd.s32 %s75, 1
      %p79 = scmp.eq.s32.totalorder %s20, 1
      %p80 = scmp.ne.s32.totalorder %s75, %s77
      %p81 = scmp.eq.s32.totalorder %s20, 0
      %p82 = por %p80, %p81
      %p83 = scmp.ne.s32.totalorder %s75, %s77
      %p84 = scmp.eq.s32.totalorder %s25, 1
      %p85 = por %p83, %p84
      %p86 = scmp.ne.s32.totalorder %s77, %s78
      %p87 = scmp.eq.s32.totalorder %s25, 0
      %p88 = por %p86, %p87
      %p89 = scmp.ne.s32.totalorder %s77, %s78
      %p90 = scmp.eq.s32.totalorder %s26, 1
      %p91 = por %p89, %p90
      %p93 = scmp.ne.s32.totalorder %s78, %s92
      %p94 = scmp.eq.s32.totalorder %s26, 0
      %p95 = por %p93, %p94
      %s97 = sadd.s32 %s96, 1
      %p100 = scmp.eq.s32.totalorder %s20, 1
      %p101 = scmp.ne.s32.totalorder %s96, %s98
      %p102 = scmp.eq.s32.totalorder %s20, 0
      %p103 = por %p101, %p102
      %p104 = scmp.ne.s32.totalorder %s96, %s98
      %p105 = scmp.eq.s32.totalorder %s25, 1
      %p106 = por %p104, %p105
      %p107 = scmp.ne.s32.totalorder %s98, %s99
      %p108 = scmp.eq.s32.totalorder %s25, 0
      %p109 = por %p107, %p108
      %p110 = scmp.ne.s32.totalorder %s98, %s99
      %p111 = scmp.eq.s32.totalorder %s26, 1
      %p112 = por %p110, %p111
      %p114 = scmp.ne.s32.totalorder %s99, %s113
      %p115 = scmp.eq.s32.totalorder %s26, 0
      %p116 = por %p114, %p115
      %s118 = sadd.s32 %s117, 1
      %p121 = scmp.eq.s32.totalorder %s20, 1
      %p122 = scmp.ne.s32.totalorder %s117, %s119
      %p123 = scmp.eq.s32.totalorder %s20, 0
      %p124 = por %p122, %p123
      %p125 = scmp.ne.s32.totalorder %s117, %s119
      %p126 = scmp.eq.s32.totalorder %s25, 1
      %p127 = por %p125, %p126
      %p128 = scmp.ne.s32.totalorder %s119, %s120
      %p129 = scmp.eq.s32.totalorder %s25, 0
      %p130 = por %p128, %p129
      %p131 = scmp.ne.s32.totalorder %s119, %s120
      %p132 = scmp.eq.s32.totalorder %s26, 1
      %p133 = por %p131, %p132
      %p135 = scmp.ne.s32.totalorder %s120, %s134
      %p136 = scmp.eq.s32.totalorder %s26, 0
      %p137 = por %p135, %p136
      %s138 = ssub.s32 %s20, %s27
      %p139 = scmp.eq.s32.totalorder %s138, 0
      %s141 = sadd.s32 %s140, 1
      %s142 = scalar_select %p139, %s140, %s141
      %p145 = pneg %p139
      %p146 = scmp.eq.s32.totalorder %s20, 1
      %p147 = por %p145, %p146
      %p148 = scmp.ne.s32.totalorder %s140, %s143
      %p149 = scmp.eq.s32.totalorder %s20, 0
      %p150 = por %p148, %p149
      %p151 = scmp.ne.s32.totalorder %s140, %s143
      %p152 = scmp.eq.s32.totalorder %s25, 1
      %p153 = por %p151, %p152
      %p154 = scmp.ne.s32.totalorder %s143, %s144
      %p155 = scmp.eq.s32.totalorder %s25, 0
      %p156 = por %p154, %p155
      %p157 = scmp.ne.s32.totalorder %s143, %s144
      %p158 = scmp.eq.s32.totalorder %s26, 1
      %p159 = por %p157, %p158
      %p161 = scmp.ne.s32.totalorder %s144, %s160
      %p162 = scmp.eq.s32.totalorder %s26, 0
      %p163 = por %p161, %p162
      %p164 = scmp.le.s32.totalorder 1, %s20
      %p165 = scmp.lt.s32.totalorder %s20, 3
      %p166 = pnand %p164, %p165
      %p167 = pneg %p166
      // Predicated region
      $region9: #{tpu_custom_call.1} parent=5 // pred_check
        _
      $region10: #{tpu_custom_call.1} parent=5 // pred_check_branch
        %169 = sbr.rel (%p166) target = $region12
      $region11: #{tpu_custom_call.1} parent=5 // pred_region
        %s170 = ssub.s32 %s20, 1
        // Predicated region
        $region13: #{tpu_custom_call.1} parent=11 // pred_check
          %p171 = pneg %p41
        $region14: #{tpu_custom_call.1} parent=11 // pred_check_branch
          %173 = sbr.rel (%p171) target = $region16
        $region15: #{tpu_custom_call.1} parent=11 // pred_region
          _
        $region16: #{tpu_custom_call.1} parent=11 // pred_fallthru
          _
        // Predicated region
        $region17: #{tpu_custom_call.1} parent=11 // pred_check
          %p174 = pneg %p88
        $region18: #{tpu_custom_call.1} parent=11 // pred_check_branch
          %176 = sbr.rel (%p174) target = $region20
        $region19: #{tpu_custom_call.1} parent=11 // pred_region
          %s178 = ssub.s32 2048, 2048
          %179 = vsyncadd [#allocation7], %s178
          %s180 = sshll.u32 [#allocation6], 4
          %s181 = int_to_ptr.vmem [resolvable:$true] %s180
          %186 = dma.hbm_to_vmem [thread:$0]  %s2, 2048, %s181, [#allocation7], 128, 128, 8
        $region20: #{tpu_custom_call.1} parent=11 // pred_fallthru
          _
        // Predicated region
        $region21: #{tpu_custom_call.1} parent=11 // pred_check
          %p187 = pneg %p109
        $region22: #{tpu_custom_call.1} parent=11 // pred_check_branch
          %189 = sbr.rel (%p187) target = $region24
        $region23: #{tpu_custom_call.1} parent=11 // pred_region
          %s191 = ssub.s32 2048, 2048
          %192 = vsyncadd [#allocation7], %s191
          %s193 = sshll.u32 [#allocation8], 4
          %s194 = int_to_ptr.vmem [resolvable:$true] %s193
          %199 = dma.hbm_to_vmem [thread:$0]  %s3, 2048, %s194, [#allocation7], 128, 128, 8
        $region24: #{tpu_custom_call.1} parent=11 // pred_fallthru
          _
        // Predicated region
        $region25: #{tpu_custom_call.1} parent=11 // pred_check
          %p200 = pneg %p130
        $region26: #{tpu_custom_call.1} parent=11 // pred_check_branch
          %202 = sbr.rel (%p200) target = $region28
        $region27: #{tpu_custom_call.1} parent=11 // pred_region
          %s204 = ssub.s32 2048, 2048
          %205 = vsyncadd [#allocation10], %s204
          %s206 = sshll.u32 [#allocation9], 4
          %s207 = int_to_ptr.vmem [resolvable:$true] %s206
          %212 = dma.hbm_to_vmem [thread:$0]  %s4, 2048, %s207, [#allocation10], 128, 128, 8
        $region28: #{tpu_custom_call.1} parent=11 // pred_fallthru
          _
      $region12: #{tpu_custom_call.1} parent=5 // pred_fallthru
        _
      %p213 = scmp.lt.s32.totalorder %s20, 2
      // Predicated region
      $region29: #{tpu_custom_call.1} parent=5 // pred_check
        %p214 = pneg %p213
      $region30: #{tpu_custom_call.1} parent=5 // pred_check_branch
        %216 = sbr.rel (%p214) target = $region32
      $region31: #{tpu_custom_call.1} parent=5 // pred_region
        // Predicated region
        $region33: #{tpu_custom_call.1} parent=31 // pred_check
          %p217 = pneg %p61
        $region34: #{tpu_custom_call.1} parent=31 // pred_check_branch
          %219 = sbr.rel (%p217) target = $region36
        $region35: #{tpu_custom_call.1} parent=31 // pred_region
          %s220 = sand.u32 %s51, 1
          %s221 = scalar_lea.sflag [#allocation4], %s220
          %s222 = sand.u32 %s51, 1
          %s223 = smul.addr %s222, 8
          %s224 = scalar_lea.vmem [#allocation3], %s223
          %s226 = ssub.s32 128, 128
          %227 = vsyncadd %s221, %s226
          %s228 = smul.addr %s20, 128
          %s229 = scalar_lea.hbm %s1, %s228
          %s231 = sshll.u32 %s224, 4
          %s232 = int_to_ptr.vmem [resolvable:$true] %s231
          %234 = dma.hbm_to_vmem [thread:$0]  %s229, 128, %s232, %s221
        $region36: #{tpu_custom_call.1} parent=31 // pred_fallthru
          _
      $region32: #{tpu_custom_call.1} parent=5 // pred_fallthru
        _
      %p235 = scmp.le.s32.totalorder 1, %s20
      %p236 = scmp.lt.s32.totalorder %s20, 3
      %p237 = pnand %p235, %p236
      %p238 = pneg %p237
      // Predicated region
      $region37: #{tpu_custom_call.1} parent=5 // pred_check
        _
      $region38: #{tpu_custom_call.1} parent=5 // pred_check_branch
        %240 = sbr.rel (%p237) target = $region40
      $region39: #{tpu_custom_call.1} parent=5 // pred_region
        %s241 = ssub.s32 %s20, 1
        %s242 = sand.u32 %s54, 1
        %s243 = scalar_lea.sflag [#allocation4], %s242
        %s244 = sand.u32 %s54, 1
        %s245 = smul.addr %s244, 8
        %s246 = scalar_lea.vmem [#allocation3], %s245
        // Predicated region
        $region41: #{tpu_custom_call.1} parent=39 // pred_check
          %p247 = pneg %p67
        $region42: #{tpu_custom_call.1} parent=39 // pred_check_branch
          %249 = sbr.rel (%p247) target = $region44
        $region43: #{tpu_custom_call.1} parent=39 // pred_region
          %250 = dma.done %s243, 128
        $region44: #{tpu_custom_call.1} parent=39 // pred_fallthru
          _
        // Predicated region
        $region45: #{tpu_custom_call.1} parent=39 // pred_check
          %p251 = pneg %p88
        $region46: #{tpu_custom_call.1} parent=39 // pred_check_branch
          %253 = sbr.rel (%p251) target = $region48
        $region47: #{tpu_custom_call.1} parent=39 // pred_region
          %254 = dma.done [#allocation7], 2048
        $region48: #{tpu_custom_call.1} parent=39 // pred_fallthru
          _
        // Predicated region
        $region49: #{tpu_custom_call.1} parent=39 // pred_check
          %p255 = pneg %p109
        $region50: #{tpu_custom_call.1} parent=39 // pred_check_branch
          %257 = sbr.rel (%p255) target = $region52
        $region51: #{tpu_custom_call.1} parent=39 // pred_region
          %258 = dma.done [#allocation7], 2048
        $region52: #{tpu_custom_call.1} parent=39 // pred_fallthru
          _
        // Predicated region
        $region53: #{tpu_custom_call.1} parent=39 // pred_check
          %p259 = pneg %p130
        $region54: #{tpu_custom_call.1} parent=39 // pred_check_branch
          %261 = sbr.rel (%p259) target = $region56
        $region55: #{tpu_custom_call.1} parent=39 // pred_region
          %262 = dma.done [#allocation10], 2048
        $region56: #{tpu_custom_call.1} parent=39 // pred_fallthru
          _
        %p263 = pneg %p41
        %p264 = pneg %p38
        %s265 = sand.u32 %s54, 1
        %s266 = scalar_lea.sflag [#allocation4], %s265
        %s267 = sand.u32 %s54, 1
        %s268 = smul.addr %s267, 8
        %s269 = scalar_lea.vmem [#allocation3], %s268
        %p270 = pneg %p67
        %p271 = pneg %p64
        %p272 = pneg %p88
        %p273 = pneg %p85
        %p274 = pneg %p109
        %p275 = pneg %p106
        %p276 = pneg %p130
        %p277 = pneg %p127
        %p278 = pneg %p156
        %p279 = pneg %p153
        %s280 = sand.u32 %s143, 1
        %s281 = scalar_lea.sflag [#allocation5], %s280
        %s282 = sand.u32 %s143, 1
        %s283 = smul.addr %s282, 8
        %s284 = scalar_lea.vmem [#allocation11], %s283
        %s285 = sld [smem:[#allocation2]]
        %v286 = vld [vmem:[%s246] sm:$0xff]
        %v287 = vld [vmem:[#allocation6] sm:$0xff]
        %v288 = vld [vmem:[#allocation6 + $0x8] sm:$0xff]
        %v289 = vld [vmem:[#allocation6 + $0x10] sm:$0xff]
        %v290 = vld [vmem:[#allocation6 + $0x18] sm:$0xff]
        %v291 = vld [vmem:[#allocation6 + $0x20] sm:$0xff]
        %v292 = vld [vmem:[#allocation6 + $0x28] sm:$0xff]
        %v293 = vld [vmem:[#allocation6 + $0x30] sm:$0xff]
        %v294 = vld [vmem:[#allocation6 + $0x38] sm:$0xff]
        %v295 = vld [vmem:[#allocation6 + $0x40] sm:$0xff]
        %v296 = vld [vmem:[#allocation6 + $0x48] sm:$0xff]
        %v297 = vld [vmem:[#allocation6 + $0x50] sm:$0xff]
        %v298 = vld [vmem:[#allocation6 + $0x58] sm:$0xff]
        %v299 = vld [vmem:[#allocation6 + $0x60] sm:$0xff]
        %v300 = vld [vmem:[#allocation6 + $0x68] sm:$0xff]
        %v301 = vld [vmem:[#allocation6 + $0x70] sm:$0xff]
        %v302 = vld [vmem:[#allocation6 + $0x78] sm:$0xff]
        %303 = vmatprep.subr.mxu0 0.0
        %304 = vmatpush1.msra.mxu0 %v287
        %305 = vmatprep.subr.mxu0 0.0
        %306 = vmatpush1.msra.mxu0 %v288
        %307 = vmatprep.subr.mxu0 0.0
        %308 = vmatpush1.msra.mxu0 %v289
        %309 = vmatprep.subr.mxu0 0.0
        %310 = vmatpush1.msra.mxu0 %v290
        %311 = vmatprep.subr.mxu0 0.0
        %312 = vmatpush1.msra.mxu0 %v291
        %313 = vmatprep.subr.mxu0 0.0
        %314 = vmatpush1.msra.mxu0 %v292
        %315 = vmatprep.subr.mxu0 0.0
        %316 = vmatpush1.msra.mxu0 %v293
        %317 = vmatprep.subr.mxu0 0.0
        %318 = vmatpush1.msra.mxu0 %v294
        %319 = vmatprep.subr.mxu0 0.0
        %320 = vmatpush1.msra.mxu0 %v295
        %321 = vmatprep.subr.mxu0 0.0
        %322 = vmatpush1.msra.mxu0 %v296
        %323 = vmatprep.subr.mxu0 0.0
        %324 = vmatpush1.msra.mxu0 %v297
        %325 = vmatprep.subr.mxu0 0.0
        %326 = vmatpush1.msra.mxu0 %v298
        %327 = vmatprep.subr.mxu0 0.0
        %328 = vmatpush1.msra.mxu0 %v299
        %329 = vmatprep.subr.mxu0 0.0
        %330 = vmatpush1.msra.mxu0 %v300
        %331 = vmatprep.subr.mxu0 0.0
        %332 = vmatpush1.msra.mxu0 %v301
        %333 = vmatprep.subr.mxu0 0.0
        %334 = vmatpush1.msra.mxu0 %v302
        %335 = vmatprep.subr.mxu0 0.0
        %336 = vmatpush1.msra.mxu0 0.0
        %337 = vmatprep.subr.mxu0 0.0
        %338 = vmatpush1.msra.mxu0 0.0
        %339 = vmatprep.subr.mxu0 0.0
        %340 = vmatpush1.msra.mxu0 0.0
        %341 = vmatprep.subr.mxu0 0.0
        %342 = vmatpush1.msra.mxu0 0.0
        %343 = vmatprep.subr.mxu0 0.0
        %344 = vmatpush1.msra.mxu0 0.0
        %345 = vmatprep.subr.mxu0 0.0
        %346 = vmatpush1.msra.mxu0 0.0
        %347 = vmatprep.subr.mxu0 0.0
        %348 = vmatpush1.msra.mxu0 0.0
        %349 = vmatprep.subr.mxu0 0.0
        %350 = vmatpush1.msra.mxu0 0.0
        %351 = vmatprep.subr.mxu0 0.0
        %352 = vmatpush1.msra.mxu0 0.0
        %353 = vmatprep.subr.mxu0 0.0
        %354 = vmatpush1.msra.mxu0 0.0
        %355 = vmatprep.subr.mxu0 0.0
        %356 = vmatpush1.msra.mxu0 0.0
        %357 = vmatprep.subr.mxu0 0.0
        %358 = vmatpush1.msra.mxu0 0.0
        %359 = vmatprep.subr.mxu0 0.0
        %360 = vmatpush1.msra.mxu0 0.0
        %361 = vmatprep.subr.mxu0 0.0
        %362 = vmatpush1.msra.mxu0 0.0
        %363 = vmatprep.subr.mxu0 0.0
        %364 = vmatpush1.msra.mxu0 0.0
        %365 = vmatprep.subr.mxu0 0.0
        %366 = vmatpush1.msra.mxu0 0.0
        %367 = vmatprep.mubr.f32.mxu0 0.0
        %368 = vmatmul.mubr.f32.gmra.mrb[0].mxu0 %v286
        %v369 = vpop.f32.mrb[0].mxu0
        %v370 = vadd.f32 0.0, %v369
        %v371 = vpop.f32.mrb[0].mxu0
        %372 = vdwg.mxu0
        %vm373 = vcmp.gt.f32.partialorder %v370, 0.0
        %v374 = vmul.f32 %v370, 0.2679492
        %v375 = vsel %vm373, %v370, %v374
        %v376 = vld [vmem:[#allocation8] sm:$0xff]
        %v377 = vld [vmem:[#allocation8 + $0x8] sm:$0xff]
        %v378 = vld [vmem:[#allocation8 + $0x10] sm:$0xff]
        %v379 = vld [vmem:[#allocation8 + $0x18] sm:$0xff]
        %v380 = vld [vmem:[#allocation8 + $0x20] sm:$0xff]
        %v381 = vld [vmem:[#allocation8 + $0x28] sm:$0xff]
        %v382 = vld [vmem:[#allocation8 + $0x30] sm:$0xff]
        %v383 = vld [vmem:[#allocation8 + $0x38] sm:$0xff]
        %v384 = vld [vmem:[#allocation8 + $0x40] sm:$0xff]
        %v385 = vld [vmem:[#allocation8 + $0x48] sm:$0xff]
        %v386 = vld [vmem:[#allocation8 + $0x50] sm:$0xff]
        %v387 = vld [vmem:[#allocation8 + $0x58] sm:$0xff]
        %v388 = vld [vmem:[#allocation8 + $0x60] sm:$0xff]
        %v389 = vld [vmem:[#allocation8 + $0x68] sm:$0xff]
        %v390 = vld [vmem:[#allocation8 + $0x70] sm:$0xff]
        %v391 = vld [vmem:[#allocation8 + $0x78] sm:$0xff]
        %392 = vmatprep.subr.mxu0 0.0
        %393 = vmatpush1.msra.mxu0 %v376
        %394 = vmatprep.subr.mxu0 0.0
        %395 = vmatpush1.msra.mxu0 %v377
        %396 = vmatprep.subr.mxu0 0.0
        %397 = vmatpush1.msra.mxu0 %v378
        %398 = vmatprep.subr.mxu0 0.0
        %399 = vmatpush1.msra.mxu0 %v379
        %400 = vmatprep.subr.mxu0 0.0
        %401 = vmatpush1.msra.mxu0 %v380
        %402 = vmatprep.subr.mxu0 0.0
        %403 = vmatpush1.msra.mxu0 %v381
        %404 = vmatprep.subr.mxu0 0.0
        %405 = vmatpush1.msra.mxu0 %v382
        %406 = vmatprep.subr.mxu0 0.0
        %407 = vmatpush1.msra.mxu0 %v383
        %408 = vmatprep.subr.mxu0 0.0
        %409 = vmatpush1.msra.mxu0 %v384
        %410 = vmatprep.subr.mxu0 0.0
        %411 = vmatpush1.msra.mxu0 %v385
        %412 = vmatprep.subr.mxu0 0.0
        %413 = vmatpush1.msra.mxu0 %v386
        %414 = vmatprep.subr.mxu0 0.0
        %415 = vmatpush1.msra.mxu0 %v387
        %416 = vmatprep.subr.mxu0 0.0
        %417 = vmatpush1.msra.mxu0 %v388
        %418 = vmatprep.subr.mxu0 0.0
        %419 = vmatpush1.msra.mxu0 %v389
        %420 = vmatprep.subr.mxu0 0.0
        %421 = vmatpush1.msra.mxu0 %v390
        %422 = vmatprep.subr.mxu0 0.0
        %423 = vmatpush1.msra.mxu0 %v391
        %424 = vmatprep.subr.mxu0 0.0
        %425 = vmatpush1.msra.mxu0 0.0
        %426 = vmatprep.subr.mxu0 0.0
        %427 = vmatpush1.msra.mxu0 0.0
        %428 = vmatprep.subr.mxu0 0.0
        %429 = vmatpush1.msra.mxu0 0.0
        %430 = vmatprep.subr.mxu0 0.0
        %431 = vmatpush1.msra.mxu0 0.0
        %432 = vmatprep.subr.mxu0 0.0
        %433 = vmatpush1.msra.mxu0 0.0
        %434 = vmatprep.subr.mxu0 0.0
        %435 = vmatpush1.msra.mxu0 0.0
        %436 = vmatprep.subr.mxu0 0.0
        %437 = vmatpush1.msra.mxu0 0.0
        %438 = vmatprep.subr.mxu0 0.0
        %439 = vmatpush1.msra.mxu0 0.0
        %440 = vmatprep.subr.mxu0 0.0
        %441 = vmatpush1.msra.mxu0 0.0
        %442 = vmatprep.subr.mxu0 0.0
        %443 = vmatpush1.msra.mxu0 0.0
        %444 = vmatprep.subr.mxu0 0.0
        %445 = vmatpush1.msra.mxu0 0.0
        %446 = vmatprep.subr.mxu0 0.0
        %447 = vmatpush1.msra.mxu0 0.0
        %448 = vmatprep.subr.mxu0 0.0
        %449 = vmatpush1.msra.mxu0 0.0
        %450 = vmatprep.subr.mxu0 0.0
        %451 = vmatpush1.msra.mxu0 0.0
        %452 = vmatprep.subr.mxu0 0.0
        %453 = vmatpush1.msra.mxu0 0.0
        %454 = vmatprep.subr.mxu0 0.0
        %455 = vmatpush1.msra.mxu0 0.0
        %456 = vmatprep.mubr.f32.mxu0 0.0
        %457 = vmatmul.mubr.f32.gmra.mrb[0].mxu0 %v375
        %v458 = vpop.f32.mrb[0].mxu0
        %v459 = vadd.f32 0.0, %v458
        %v460 = vpop.f32.mrb[0].mxu0
        %461 = vdwg.mxu0
        %vm462 = vcmp.gt.f32.partialorder %v459, 0.0
        %v463 = vmul.f32 %v459, 0.2679492
        %v464 = vsel %vm462, %v459, %v463
        %v465 = vld [vmem:[#allocation9] sm:$0xff]
        %v466 = vld [vmem:[#allocation9 + $0x8] sm:$0xff]
        %v467 = vld [vmem:[#allocation9 + $0x10] sm:$0xff]
        %v468 = vld [vmem:[#allocation9 + $0x18] sm:$0xff]
        %v469 = vld [vmem:[#allocation9 + $0x20] sm:$0xff]
        %v470 = vld [vmem:[#allocation9 + $0x28] sm:$0xff]
        %v471 = vld [vmem:[#allocation9 + $0x30] sm:$0xff]
        %v472 = vld [vmem:[#allocation9 + $0x38] sm:$0xff]
        %v473 = vld [vmem:[#allocation9 + $0x40] sm:$0xff]
        %v474 = vld [vmem:[#allocation9 + $0x48] sm:$0xff]
        %v475 = vld [vmem:[#allocation9 + $0x50] sm:$0xff]
        %v476 = vld [vmem:[#allocation9 + $0x58] sm:$0xff]
        %v477 = vld [vmem:[#allocation9 + $0x60] sm:$0xff]
        %v478 = vld [vmem:[#allocation9 + $0x68] sm:$0xff]
        %v479 = vld [vmem:[#allocation9 + $0x70] sm:$0xff]
        %v480 = vld [vmem:[#allocation9 + $0x78] sm:$0xff]
        %481 = vmatprep.subr.mxu0 0.0
        %482 = vmatpush1.msra.mxu0 %v465
        %483 = vmatprep.subr.mxu0 0.0
        %484 = vmatpush1.msra.mxu0 %v466
        %485 = vmatprep.subr.mxu0 0.0
        %486 = vmatpush1.msra.mxu0 %v467
        %487 = vmatprep.subr.mxu0 0.0
        %488 = vmatpush1.msra.mxu0 %v468
        %489 = vmatprep.subr.mxu0 0.0
        %490 = vmatpush1.msra.mxu0 %v469
        %491 = vmatprep.subr.mxu0 0.0
        %492 = vmatpush1.msra.mxu0 %v470
        %493 = vmatprep.subr.mxu0 0.0
        %494 = vmatpush1.msra.mxu0 %v471
        %495 = vmatprep.subr.mxu0 0.0
        %496 = vmatpush1.msra.mxu0 %v472
        %497 = vmatprep.subr.mxu0 0.0
        %498 = vmatpush1.msra.mxu0 %v473
        %499 = vmatprep.subr.mxu0 0.0
        %500 = vmatpush1.msra.mxu0 %v474
        %501 = vmatprep.subr.mxu0 0.0
        %502 = vmatpush1.msra.mxu0 %v475
        %503 = vmatprep.subr.mxu0 0.0
        %504 = vmatpush1.msra.mxu0 %v476
        %505 = vmatprep.subr.mxu0 0.0
        %506 = vmatpush1.msra.mxu0 %v477
        %507 = vmatprep.subr.mxu0 0.0
        %508 = vmatpush1.msra.mxu0 %v478
        %509 = vmatprep.subr.mxu0 0.0
        %510 = vmatpush1.msra.mxu0 %v479
        %511 = vmatprep.subr.mxu0 0.0
        %512 = vmatpush1.msra.mxu0 %v480
        %513 = vmatprep.subr.mxu0 0.0
        %514 = vmatpush1.msra.mxu0 0.0
        %515 = vmatprep.subr.mxu0 0.0
        %516 = vmatpush1.msra.mxu0 0.0
        %517 = vmatprep.subr.mxu0 0.0
        %518 = vmatpush1.msra.mxu0 0.0
        %519 = vmatprep.subr.mxu0 0.0
        %520 = vmatpush1.msra.mxu0 0.0
        %521 = vmatprep.subr.mxu0 0.0
        %522 = vmatpush1.msra.mxu0 0.0
        %523 = vmatprep.subr.mxu0 0.0
        %524 = vmatpush1.msra.mxu0 0.0
        %525 = vmatprep.subr.mxu0 0.0
        %526 = vmatpush1.msra.mxu0 0.0
        %527 = vmatprep.subr.mxu0 0.0
        %528 = vmatpush1.msra.mxu0 0.0
        %529 = vmatprep.subr.mxu0 0.0
        %530 = vmatpush1.msra.mxu0 0.0
        %531 = vmatprep.subr.mxu0 0.0
        %532 = vmatpush1.msra.mxu0 0.0
        %533 = vmatprep.subr.mxu0 0.0
        %534 = vmatpush1.msra.mxu0 0.0
        %535 = vmatprep.subr.mxu0 0.0
        %536 = vmatpush1.msra.mxu0 0.0
        %537 = vmatprep.subr.mxu0 0.0
        %538 = vmatpush1.msra.mxu0 0.0
        %539 = vmatprep.subr.mxu0 0.0
        %540 = vmatpush1.msra.mxu0 0.0
        %541 = vmatprep.subr.mxu0 0.0
        %542 = vmatpush1.msra.mxu0 0.0
        %543 = vmatprep.subr.mxu0 0.0
        %544 = vmatpush1.msra.mxu0 0.0
        %545 = vmatprep.mubr.f32.mxu0 0.0
        %546 = vmatmul.mubr.f32.gmra.mrb[0].mxu0 %v464
        %v547 = vpop.f32.mrb[0].mxu0
        %v548 = vadd.f32 0.0, %v547
        %v549 = vpop.f32.mrb[0].mxu0
        %550 = vdwg.mxu0
        %v551 = vstv %s285
        %v552 = vmul.f32 %v548, %v551
        %553 = vst [vmem:[%s284] sm:$0xff] %v552
        %s554 = sand.u32 %s143, 1
        %s555 = scalar_lea.sflag [#allocation5], %s554
        %s556 = sand.u32 %s143, 1
        %s557 = smul.addr %s556, 8
        %s558 = scalar_lea.vmem [#allocation11], %s557
        // Predicated region
        $region57: #{tpu_custom_call.1} parent=39 // pred_check
          %p559 = pneg %p153
        $region58: #{tpu_custom_call.1} parent=39 // pred_check_branch
          %561 = sbr.rel (%p559) target = $region60
        $region59: #{tpu_custom_call.1} parent=39 // pred_region
          %s563 = ssub.s32 128, 128
          %564 = vsyncadd %s555, %s563
          %s565 = smul.addr %s25, 128
          %s566 = scalar_lea.hbm %s5, %s565
          %s568 = sshll.u32 %s558, 4
          %s569 = int_to_ptr.vmem [resolvable:$true] %s568
          %571 = dma.vmem_to_hbm [thread:$0]  %s569, 128, %s566, %s555
        $region60: #{tpu_custom_call.1} parent=39 // pred_fallthru
          _
      $region40: #{tpu_custom_call.1} parent=5 // pred_fallthru
        _
      %p572 = scmp.le.s32.totalorder 2, %s20
      // Predicated region
      $region61: #{tpu_custom_call.1} parent=5 // pred_check
        %p573 = pneg %p572
      $region62: #{tpu_custom_call.1} parent=5 // pred_check_branch
        %575 = sbr.rel (%p573) target = $region64
      $region63: #{tpu_custom_call.1} parent=5 // pred_region
        %s576 = ssub.s32 %s20, 2
        // Predicated region
        $region65: #{tpu_custom_call.1} parent=63 // pred_check
          %p577 = pneg %p159
        $region66: #{tpu_custom_call.1} parent=63 // pred_check_branch
          %579 = sbr.rel (%p577) target = $region68
        $region67: #{tpu_custom_call.1} parent=63 // pred_region
          %s580 = sand.u32 %s144, 1
          %s581 = scalar_lea.sflag [#allocation5], %s580
          %s582 = sand.u32 %s144, 1
          %s583 = smul.addr %s582, 8
          %s584 = scalar_lea.vmem [#allocation11], %s583
          %585 = dma.done %s581, 128
        $region68: #{tpu_custom_call.1} parent=63 // pred_fallthru
          _
      $region64: #{tpu_custom_call.1} parent=5 // pred_fallthru
        _
    $region6: #{tpu_custom_call.1} parent=1 // loop_footer
      %s24 = sadd.s32 1, %s20
    $region7: #{tpu_custom_call.1} parent=1 // loop_footer_branch
      %19 = sbr.rel target = $region3
    $region8: #{tpu_custom_call.1} parent=1 // loop_exit
      _
    %586 = vsyncpa [#allocation4], 1
    %s587 = scalar_lea.sflag [#allocation4], 1
    %588 = vsyncpa %s587, 1
    %589 = vsyncpa [#allocation7], 1
    %590 = vsyncpa [#allocation10], 1
    %591 = vsyncpa [#allocation5], 1
    %s592 = scalar_lea.sflag [#allocation5], 1
    %593 = vsyncpa %s592, 1

// kernel: tpu_custom_call.1
$region0: #{tpu_custom_call.1}
  #allocation0 [shape = 'u32[]', space=smem, size = 0x4, offset = 0x4, fixed_abs, tag = 'smem constant byte address 0x4 - core index']
  #allocation1 [shape = 'u32[144,128]{1,0:T(1,128)}', space=vmem, size = 0x12000, scoped, tag = 'internal scratch']
  #allocation2 [shape = 'f32[1]{0:T(128)S(6)}', space=smem, size = 0x200, scoped, tag = 'scoped memory for tpu_custom_call.1']
  %s0 = inlined_call_operand.<no memory space> [shape: f32[1], index: 0, kind: input, shape index: {}]
  %s1 = inlined_call_operand.hbm [shape: f32[16,128], index: 1, kind: input, shape index: {}]
  %s2 = inlined_call_operand.hbm [shape: f32[128,128], index: 2, kind: input, shape index: {}]
  %s3 = inlined_call_operand.hbm [shape: f32[128,128], index: 3, kind: input, shape index: {}]
  %s4 = inlined_call_operand.hbm [shape: f32[128,128], index: 4, kind: input, shape index: {}]
  %s5 = inlined_call_operand.hbm [shape: f32[16,128], index: 5, kind: output, shape index: {}]
  %s6 = sld [smem:[#allocation0]]
  $region69: #{tpu_custom_call.1} parent=0
    _
  %s8 = ssub.s32 1, %s6
  %s9 = scalar_select 0, %s8, %s6
  %10 = sst [smem:[#allocation2]] %s0
  $region1: #{tpu_custom_call.1} parent=0
    #allocation3 [shape = 'u8[8192]{0}', space=vmem, size = 0x2000, scoped, tag = 'input window, operand 1']
    #allocation4 [shape = 's32[2]{0}', space=sflag, size = 0x8, scoped, tag = 'scoped memory for tpu_custom_call.1']
    #allocation5 [shape = 's32[2]{0}', space=sflag, size = 0x8, scoped, tag = 'scoped memory for tpu_custom_call.1']
    #allocation6 [shape = 'u8[65536]{0}', space=vmem, size = 0x10000, scoped, tag = 'input window, operand 2, single buffered']
    #allocation7 [shape = 's32[1]{0}', space=sflag, size = 0x4, scoped, tag = 'scoped memory for tpu_custom_call.1']
    #allocation8 [shape = 'u8[65536]{0}', space=vmem, size = 0x10000, scoped, tag = 'input window, operand 3, single buffered']
    #allocation9 [shape = 'u8[65536]{0}', space=vmem, size = 0x10000, scoped, tag = 'input window, operand 4, single buffered']
    #allocation10 [shape = 's32[1]{0}', space=sflag, size = 0x4, scoped, tag = 'scoped memory for tpu_custom_call.1']
    #allocation11 [shape = 'u8[8192]{0}', space=vmem, size = 0x2000, scoped, tag = 'output window, operand 0']
    %11 = vsyncpa [#allocation4], 0
    %s12 = scalar_lea.sflag [#allocation4], 1
    %13 = vsyncpa %s12, 0
    %14 = vsyncpa [#allocation7], 0
    %15 = vsyncpa [#allocation10], 0
    %16 = vsyncpa [#allocation5], 0
    %s17 = scalar_lea.sflag [#allocation5], 1
    %18 = vsyncpa %s17, 0
    loop: start=0, step=1, limit=4
    $region2: #{tpu_custom_call.1} parent=1 // loop_pre_header
      _
    $region3: #{tpu_custom_call.1} parent=1 // loop_header
      %s20 = sphi 0, %s24
      %p21 = scmp.ge.s32.totalorder %s20, 4
      %s28 = sphi 0, %s28
      %s30 = sphi 0, %s28
      %s31 = sphi 0, %s30
      %s45 = sphi 0, %s31
      %s51 = sphi 0, %s53
      %s54 = sphi 0, %s51
      %s55 = sphi 0, %s54
      %s71 = sphi 0, %s55
      %s75 = sphi 0, %s75
      %s77 = sphi 0, %s75
      %s78 = sphi 0, %s77
      %s92 = sphi 0, %s78
      %s96 = sphi 0, %s96
      %s98 = sphi 0, %s96
      %s99 = sphi 0, %s98
      %s113 = sphi 0, %s99
      %s117 = sphi 0, %s117
      %s119 = sphi 0, %s117
      %s120 = sphi 0, %s119
      %s134 = sphi 0, %s120
      %s140 = sphi 0, %s142
      %s143 = sphi 0, %s140
      %s144 = sphi 0, %s143
      %s160 = sphi 0, %s144
    $region4: #{tpu_custom_call.1} parent=1 // loop_header_branch
      %23 = sbr.rel (%p21) target = $region8
    $region5: #{tpu_custom_call.1} parent=1 // loop_body
      %s25 = ssub.s32 %s20, 1
      %s26 = ssub.s32 %s20, 2
      %s27 = sadd.s32 %s20, 1
      %s29 = sadd.s32 %s28, 1
      %p32 = scmp.eq.s32.totalorder %s20, 1
      %p33 = scmp.ne.s32.totalorder %s28, %s30
      %p34 = scmp.eq.s32.totalorder %s20, 0
      %p35 = por %p33, %p34
      %p36 = scmp.ne.s32.totalorder %s28, %s30
      %p37 = scmp.eq.s32.totalorder %s25, 1
      %p38 = por %p36, %p37
      %p39 = scmp.ne.s32.totalorder %s30, %s31
      %p40 = scmp.eq.s32.totalorder %s25, 0
      %p41 = por %p39, %p40
      %p42 = scmp.ne.s32.totalorder %s30, %s31
      %p43 = scmp.eq.s32.totalorder %s26, 1
      %p44 = por %p42, %p43
      %p46 = scmp.ne.s32.totalorder %s31, %s45
      %p47 = scmp.eq.s32.totalorder %s26, 0
      %p48 = por %p46, %p47
      %s49 = ssub.s32 %s20, %s27
      %p50 = scmp.eq.s32.totalorder %s49, 0
      %s52 = sadd.s32 %s51, 1
      %s53 = scalar_select %p50, %s51, %s52
      %p56 = pneg %p50
      %p57 = scmp.eq.s32.totalorder %s20, 1
      %p58 = por %p56, %p57
      %p59 = scmp.ne.s32.totalorder %s51, %s54
      %p60 = scmp.eq.s32.totalorder %s20, 0
      %p61 = por %p59, %p60
      %p62 = scmp.ne.s32.totalorder %s51, %s54
      %p63 = scmp.eq.s32.totalorder %s25, 1
      %p64 = por %p62, %p63
      %p65 = scmp.ne.s32.totalorder %s54, %s55
      %p66 = scmp.eq.s32.totalorder %s25, 0
      %p67 = por %p65, %p66
      %p68 = scmp.ne.s32.totalorder %s54, %s55
      %p69 = scmp.eq.s32.totalorder %s26, 1
      %p70 = por %p68, %p69
      %p72 = scmp.ne.s32.totalorder %s55, %s71
      %p73 = scmp.eq.s32.totalorder %s26, 0
      %p74 = por %p72, %p73
      %s76 = sadd.s32 %s75, 1
      %p79 = scmp.eq.s32.totalorder %s20, 1
      %p80 = scmp.ne.s32.totalorder %s75, %s77
      %p81 = scmp.eq.s32.totalorder %s20, 0
      %p82 = por %p80, %p81
      %p83 = scmp.ne.s32.totalorder %s75, %s77
      %p84 = scmp.eq.s32.totalorder %s25, 1
      %p85 = por %p83, %p84
      %p86 = scmp.ne.s32.totalorder %s77, %s78
      %p87 = scmp.eq.s32.totalorder %s25, 0
      %p88 = por %p86, %p87
      %p89 = scmp.ne.s32.totalorder %s77, %s78
      %p90 = scmp.eq.s32.totalorder %s26, 1
      %p91 = por %p89, %p90
      %p93 = scmp.ne.s32.totalorder %s78, %s92
      %p94 = scmp.eq.s32.totalorder %s26, 0
      %p95 = por %p93, %p94
      %s97 = sadd.s32 %s96, 1
      %p100 = scmp.eq.s32.totalorder %s20, 1
      %p101 = scmp.ne.s32.totalorder %s96, %s98
      %p102 = scmp.eq.s32.totalorder %s20, 0
      %p103 = por %p101, %p102
      %p104 = scmp.ne.s32.totalorder %s96, %s98
      %p105 = scmp.eq.s32.totalorder %s25, 1
      %p106 = por %p104, %p105
      %p107 = scmp.ne.s32.totalorder %s98, %s99
      %p108 = scmp.eq.s32.totalorder %s25, 0
      %p109 = por %p107, %p108
      %p110 = scmp.ne.s32.totalorder %s98, %s99
      %p111 = scmp.eq.s32.totalorder %s26, 1
      %p112 = por %p110, %p111
      %p114 = scmp.ne.s32.totalorder %s99, %s113
      %p115 = scmp.eq.s32.totalorder %s26, 0
      %p116 = por %p114, %p115
      %s118 = sadd.s32 %s117, 1
      %p121 = scmp.eq.s32.totalorder %s20, 1
      %p122 = scmp.ne.s32.totalorder %s117, %s119
      %p123 = scmp.eq.s32.totalorder %s20, 0
      %p124 = por %p122, %p123
      %p125 = scmp.ne.s32.totalorder %s117, %s119
      %p126 = scmp.eq.s32.totalorder %s25, 1
      %p127 = por %p125, %p126
      %p128 = scmp.ne.s32.totalorder %s119, %s120
      %p129 = scmp.eq.s32.totalorder %s25, 0
      %p130 = por %p128, %p129
      %p131 = scmp.ne.s32.totalorder %s119, %s120
      %p132 = scmp.eq.s32.totalorder %s26, 1
      %p133 = por %p131, %p132
      %p135 = scmp.ne.s32.totalorder %s120, %s134
      %p136 = scmp.eq.s32.totalorder %s26, 0
      %p137 = por %p135, %p136
      %s138 = ssub.s32 %s20, %s27
      %p139 = scmp.eq.s32.totalorder %s138, 0
      %s141 = sadd.s32 %s140, 1
      %s142 = scalar_select %p139, %s140, %s141
      %p145 = pneg %p139
      %p146 = scmp.eq.s32.totalorder %s20, 1
      %p147 = por %p145, %p146
      %p148 = scmp.ne.s32.totalorder %s140, %s143
      %p149 = scmp.eq.s32.totalorder %s20, 0
      %p150 = por %p148, %p149
      %p151 = scmp.ne.s32.totalorder %s140, %s143
      %p152 = scmp.eq.s32.totalorder %s25, 1
      %p153 = por %p151, %p152
      %p154 = scmp.ne.s32.totalorder %s143, %s144
      %p155 = scmp.eq.s32.totalorder %s25, 0
      %p156 = por %p154, %p155
      %p157 = scmp.ne.s32.totalorder %s143, %s144
      %p158 = scmp.eq.s32.totalorder %s26, 1
      %p159 = por %p157, %p158
      %p161 = scmp.ne.s32.totalorder %s144, %s160
      %p162 = scmp.eq.s32.totalorder %s26, 0
      %p163 = por %p161, %p162
      %p164 = scmp.le.s32.totalorder 1, %s20
      %p165 = scmp.lt.s32.totalorder %s20, 3
      %p166 = pnand %p164, %p165
      %p167 = pneg %p166
      // Predicated region
      $region9: #{tpu_custom_call.1} parent=5 // pred_check
        _
      $region10: #{tpu_custom_call.1} parent=5 // pred_check_branch
        %169 = sbr.rel (%p166) target = $region12
      $region11: #{tpu_custom_call.1} parent=5 // pred_region
        %s170 = ssub.s32 %s20, 1
        // Predicated region
        $region13: #{tpu_custom_call.1} parent=11 // pred_check
          %p171 = pneg %p41
        $region14: #{tpu_custom_call.1} parent=11 // pred_check_branch
          %173 = sbr.rel (%p171) target = $region16
        $region15: #{tpu_custom_call.1} parent=11 // pred_region
          _
        $region16: #{tpu_custom_call.1} parent=11 // pred_fallthru
          _
        // Predicated region
        $region17: #{tpu_custom_call.1} parent=11 // pred_check
          %p174 = pneg %p88
        $region18: #{tpu_custom_call.1} parent=11 // pred_check_branch
          %176 = sbr.rel (%p174) target = $region20
        $region19: #{tpu_custom_call.1} parent=11 // pred_region
          %s178 = ssub.s32 2048, 2048
          %179 = vsyncadd [#allocation7], %s178
          %s180 = sshll.u32 [#allocation6], 4
          %s181 = int_to_ptr.vmem [resolvable:$true] %s180
          %186 = dma.hbm_to_vmem [thread:$0]  %s2, 2048, %s181, [#allocation7], 128, 128, 8
        $region20: #{tpu_custom_call.1} parent=11 // pred_fallthru
          _
        // Predicated region
        $region21: #{tpu_custom_call.1} parent=11 // pred_check
          %p187 = pneg %p109
        $region22: #{tpu_custom_call.1} parent=11 // pred_check_branch
          %189 = sbr.rel (%p187) target = $region24
        $region23: #{tpu_custom_call.1} parent=11 // pred_region
          %s191 = ssub.s32 2048, 2048
          %192 = vsyncadd [#allocation7], %s191
          %s193 = sshll.u32 [#allocation8], 4
          %s194 = int_to_ptr.vmem [resolvable:$true] %s193
          %199 = dma.hbm_to_vmem [thread:$0]  %s3, 2048, %s194, [#allocation7], 128, 128, 8
        $region24: #{tpu_custom_call.1} parent=11 // pred_fallthru
          _
        // Predicated region
        $region25: #{tpu_custom_call.1} parent=11 // pred_check
          %p200 = pneg %p130
        $region26: #{tpu_custom_call.1} parent=11 // pred_check_branch
          %202 = sbr.rel (%p200) target = $region28
        $region27: #{tpu_custom_call.1} parent=11 // pred_region
          %s204 = ssub.s32 2048, 2048
          %205 = vsyncadd [#allocation10], %s204
          %s206 = sshll.u32 [#allocation9], 4
          %s207 = int_to_ptr.vmem [resolvable:$true] %s206
          %212 = dma.hbm_to_vmem [thread:$0]  %s4, 2048, %s207, [#allocation10], 128, 128, 8
        $region28: #{tpu_custom_call.1} parent=11 // pred_fallthru
          _
      $region12: #{tpu_custom_call.1} parent=5 // pred_fallthru
        _
      %p213 = scmp.lt.s32.totalorder %s20, 2
      // Predicated region
      $region29: #{tpu_custom_call.1} parent=5 // pred_check
        %p214 = pneg %p213
      $region30: #{tpu_custom_call.1} parent=5 // pred_check_branch
        %216 = sbr.rel (%p214) target = $region32
      $region31: #{tpu_custom_call.1} parent=5 // pred_region
        // Predicated region
        $region33: #{tpu_custom_call.1} parent=31 // pred_check
          %p217 = pneg %p61
        $region34: #{tpu_custom_call.1} parent=31 // pred_check_branch
          %219 = sbr.rel (%p217) target = $region36
        $region35: #{tpu_custom_call.1} parent=31 // pred_region
          %s220 = sand.u32 %s51, 1
          %s221 = scalar_lea.sflag [#allocation4], %s220
          %s222 = sand.u32 %s51, 1
          %s223 = smul.addr %s222, 8
          %s224 = scalar_lea.vmem [#allocation3], %s223
          %s226 = ssub.s32 128, 128
          %227 = vsyncadd %s221, %s226
          %s228 = smul.addr %s20, 128
          %s229 = scalar_lea.hbm %s1, %s228
          %s231 = sshll.u32 %s224, 4
          %s232 = int_to_ptr.vmem [resolvable:$true] %s231
          %234 = dma.hbm_to_vmem [thread:$0]  %s229, 128, %s232, %s221
        $region36: #{tpu_custom_call.1} parent=31 // pred_fallthru
          _
      $region32: #{tpu_custom_call.1} parent=5 // pred_fallthru
        _
      %p235 = scmp.le.s32.totalorder 1, %s20
      %p236 = scmp.lt.s32.totalorder %s20, 3
      %p237 = pnand %p235, %p236
      %p238 = pneg %p237
      // Predicated region
      $region37: #{tpu_custom_call.1} parent=5 // pred_check
        _
      $region38: #{tpu_custom_call.1} parent=5 // pred_check_branch
        %240 = sbr.rel (%p237) target = $region40
      $region39: #{tpu_custom_call.1} parent=5 // pred_region
        %s241 = ssub.s32 %s20, 1
        %s242 = sand.u32 %s54, 1
        %s243 = scalar_lea.sflag [#allocation4], %s242
        %s244 = sand.u32 %s54, 1
        %s245 = smul.addr %s244, 8
        %s246 = scalar_lea.vmem [#allocation3], %s245
        // Predicated region
        $region41: #{tpu_custom_call.1} parent=39 // pred_check
          %p247 = pneg %p67
        $region42: #{tpu_custom_call.1} parent=39 // pred_check_branch
          %249 = sbr.rel (%p247) target = $region44
        $region43: #{tpu_custom_call.1} parent=39 // pred_region
          %250 = dma.done %s243, 128
        $region44: #{tpu_custom_call.1} parent=39 // pred_fallthru
          _
        // Predicated region
        $region45: #{tpu_custom_call.1} parent=39 // pred_check
          %p251 = pneg %p88
        $region46: #{tpu_custom_call.1} parent=39 // pred_check_branch
          %253 = sbr.rel (%p251) target = $region48
        $region47: #{tpu_custom_call.1} parent=39 // pred_region
          %254 = dma.done [#allocation7], 2048
        $region48: #{tpu_custom_call.1} parent=39 // pred_fallthru
          _
        // Predicated region
        $region49: #{tpu_custom_call.1} parent=39 // pred_check
          %p255 = pneg %p109
        $region50: #{tpu_custom_call.1} parent=39 // pred_check_branch
          %257 = sbr.rel (%p255) target = $region52
        $region51: #{tpu_custom_call.1} parent=39 // pred_region
          %258 = dma.done [#allocation7], 2048
        $region52: #{tpu_custom_call.1} parent=39 // pred_fallthru
          _
        // Predicated region
        $region53: #{tpu_custom_call.1} parent=39 // pred_check
          %p259 = pneg %p130
        $region54: #{tpu_custom_call.1} parent=39 // pred_check_branch
          %261 = sbr.rel (%p259) target = $region56
        $region55: #{tpu_custom_call.1} parent=39 // pred_region
          %262 = dma.done [#allocation10], 2048
        $region56: #{tpu_custom_call.1} parent=39 // pred_fallthru
          _
        %p263 = pneg %p41
        %p264 = pneg %p38
        %s265 = sand.u32 %s54, 1
        %s266 = scalar_lea.sflag [#allocation4], %s265
        %s267 = sand.u32 %s54, 1
        %s268 = smul.addr %s267, 8
        %s269 = scalar_lea.vmem [#allocation3], %s268
        %p270 = pneg %p67
        %p271 = pneg %p64
        %p272 = pneg %p88
        %p273 = pneg %p85
        %p274 = pneg %p109
        %p275 = pneg %p106
        %p276 = pneg %p130
        %p277 = pneg %p127
        %p278 = pneg %p156
        %p279 = pneg %p153
        %s280 = sand.u32 %s143, 1
        %s281 = scalar_lea.sflag [#allocation5], %s280
        %s282 = sand.u32 %s143, 1
        %s283 = smul.addr %s282, 8
        %s284 = scalar_lea.vmem [#allocation11], %s283
        %s285 = sld [smem:[#allocation2]]
        %v286 = vld [vmem:[%s246] sm:$0xff]
        %v287 = vld [vmem:[#allocation6] sm:$0xff]
        %v288 = vld [vmem:[#allocation6 + $0x8] sm:$0xff]
        %v289 = vld [vmem:[#allocation6 + $0x10] sm:$0xff]
        %v290 = vld [vmem:[#allocation6 + $0x18] sm:$0xff]
        %v291 = vld [vmem:[#allocation6 + $0x20] sm:$0xff]
        %v292 = vld [vmem:[#allocation6 + $0x28] sm:$0xff]
        %v293 = vld [vmem:[#allocation6 + $0x30] sm:$0xff]
        %v294 = vld [vmem:[#allocation6 + $0x38] sm:$0xff]
        %v295 = vld [vmem:[#allocation6 + $0x40] sm:$0xff]
        %v296 = vld [vmem:[#allocation6 + $0x48] sm:$0xff]
        %v297 = vld [vmem:[#allocation6 + $0x50] sm:$0xff]
        %v298 = vld [vmem:[#allocation6 + $0x58] sm:$0xff]
        %v299 = vld [vmem:[#allocation6 + $0x60] sm:$0xff]
        %v300 = vld [vmem:[#allocation6 + $0x68] sm:$0xff]
        %v301 = vld [vmem:[#allocation6 + $0x70] sm:$0xff]
        %v302 = vld [vmem:[#allocation6 + $0x78] sm:$0xff]
        %303 = vmatprep.subr.mxu0 0.0
        %304 = vmatpush1.msra.mxu0 %v287
        %305 = vmatprep.subr.mxu0 0.0
        %306 = vmatpush1.msra.mxu0 %v288
        %307 = vmatprep.subr.mxu0 0.0
        %308 = vmatpush1.msra.mxu0 %v289
        %309 = vmatprep.subr.mxu0 0.0
        %310 = vmatpush1.msra.mxu0 %v290
        %311 = vmatprep.subr.mxu0 0.0
        %312 = vmatpush1.msra.mxu0 %v291
        %313 = vmatprep.subr.mxu0 0.0
        %314 = vmatpush1.msra.mxu0 %v292
        %315 = vmatprep.subr.mxu0 0.0
        %316 = vmatpush1.msra.mxu0 %v293
        %317 = vmatprep.subr.mxu0 0.0
        %318 = vmatpush1.msra.mxu0 %v294
        %319 = vmatprep.subr.mxu0 0.0
        %320 = vmatpush1.msra.mxu0 %v295
        %321 = vmatprep.subr.mxu0 0.0
        %322 = vmatpush1.msra.mxu0 %v296
        %323 = vmatprep.subr.mxu0 0.0
        %324 = vmatpush1.msra.mxu0 %v297
        %325 = vmatprep.subr.mxu0 0.0
        %326 = vmatpush1.msra.mxu0 %v298
        %327 = vmatprep.subr.mxu0 0.0
        %328 = vmatpush1.msra.mxu0 %v299
        %329 = vmatprep.subr.mxu0 0.0
        %330 = vmatpush1.msra.mxu0 %v300
        %331 = vmatprep.subr.mxu0 0.0
        %332 = vmatpush1.msra.mxu0 %v301
        %333 = vmatprep.subr.mxu0 0.0
        %334 = vmatpush1.msra.mxu0 %v302
        %335 = vmatprep.subr.mxu0 0.0
        %336 = vmatpush1.msra.mxu0 0.0
        %337 = vmatprep.subr.mxu0 0.0
        %338 = vmatpush1.msra.mxu0 0.0
        %339 = vmatprep.subr.mxu0 0.0
        %340 = vmatpush1.msra.mxu0 0.0
        %341 = vmatprep.subr.mxu0 0.0
        %342 = vmatpush1.msra.mxu0 0.0
        %343 = vmatprep.subr.mxu0 0.0
        %344 = vmatpush1.msra.mxu0 0.0
        %345 = vmatprep.subr.mxu0 0.0
        %346 = vmatpush1.msra.mxu0 0.0
        %347 = vmatprep.subr.mxu0 0.0
        %348 = vmatpush1.msra.mxu0 0.0
        %349 = vmatprep.subr.mxu0 0.0
        %350 = vmatpush1.msra.mxu0 0.0
        %351 = vmatprep.subr.mxu0 0.0
        %352 = vmatpush1.msra.mxu0 0.0
        %353 = vmatprep.subr.mxu0 0.0
        %354 = vmatpush1.msra.mxu0 0.0
        %355 = vmatprep.subr.mxu0 0.0
        %356 = vmatpush1.msra.mxu0 0.0
        %357 = vmatprep.subr.mxu0 0.0
        %358 = vmatpush1.msra.mxu0 0.0
        %359 = vmatprep.subr.mxu0 0.0
        %360 = vmatpush1.msra.mxu0 0.0
        %361 = vmatprep.subr.mxu0 0.0
        %362 = vmatpush1.msra.mxu0 0.0
        %363 = vmatprep.subr.mxu0 0.0
        %364 = vmatpush1.msra.mxu0 0.0
        %365 = vmatprep.subr.mxu0 0.0
        %366 = vmatpush1.msra.mxu0 0.0
        %367 = vmatprep.mubr.f32.mxu0 0.0
        %368 = vmatmul.mubr.f32.gmra.mrb[0].mxu0 %v286
        %v369 = vpop.f32.mrb[0].mxu0
        %v370 = vadd.f32 0.0, %v369
        %v371 = vpop.f32.mrb[0].mxu0
        %372 = vdwg.mxu0
        %vm373 = vcmp.gt.f32.partialorder %v370, 0.0
        %v374 = vmul.f32 %v370, 0.2679492
        %v375 = vsel %vm373, %v370, %v374
        %v376 = vld [vmem:[#allocation8] sm:$0xff]
        %v377 = vld [vmem:[#allocation8 + $0x8] sm:$0xff]
        %v378 = vld [vmem:[#allocation8 + $0x10] sm:$0xff]
        %v379 = vld [vmem:[#allocation8 + $0x18] sm:$0xff]
        %v380 = vld [vmem:[#allocation8 + $0x20] sm:$0xff]
        %v381 = vld [vmem:[#allocation8 + $0x28] sm:$0xff]
        %v382 = vld [vmem:[#allocation8 + $0x30] sm:$0xff]
        %v383 = vld [vmem:[#allocation8 + $0x38] sm:$0xff]
        %v384 = vld [vmem:[#allocation8 + $0x40] sm:$0xff]
        %v385 = vld [vmem:[#allocation8 + $0x48] sm:$0xff]
        %v386 = vld [vmem:[#allocation8 + $0x50] sm:$0xff]
        %v387 = vld [vmem:[#allocation8 + $0x58] sm:$0xff]
        %v388 = vld [vmem:[#allocation8 + $0x60] sm:$0xff]
        %v389 = vld [vmem:[#allocation8 + $0x68] sm:$0xff]
        %v390 = vld [vmem:[#allocation8 + $0x70] sm:$0xff]
        %v391 = vld [vmem:[#allocation8 + $0x78] sm:$0xff]
        %392 = vmatprep.subr.mxu0 0.0
        %393 = vmatpush1.msra.mxu0 %v376
        %394 = vmatprep.subr.mxu0 0.0
        %395 = vmatpush1.msra.mxu0 %v377
        %396 = vmatprep.subr.mxu0 0.0
        %397 = vmatpush1.msra.mxu0 %v378
        %398 = vmatprep.subr.mxu0 0.0
        %399 = vmatpush1.msra.mxu0 %v379
        %400 = vmatprep.subr.mxu0 0.0
        %401 = vmatpush1.msra.mxu0 %v380
        %402 = vmatprep.subr.mxu0 0.0
        %403 = vmatpush1.msra.mxu0 %v381
        %404 = vmatprep.subr.mxu0 0.0
        %405 = vmatpush1.msra.mxu0 %v382
        %406 = vmatprep.subr.mxu0 0.0
        %407 = vmatpush1.msra.mxu0 %v383
        %408 = vmatprep.subr.mxu0 0.0
        %409 = vmatpush1.msra.mxu0 %v384
        %410 = vmatprep.subr.mxu0 0.0
        %411 = vmatpush1.msra.mxu0 %v385
        %412 = vmatprep.subr.mxu0 0.0
        %413 = vmatpush1.msra.mxu0 %v386
        %414 = vmatprep.subr.mxu0 0.0
        %415 = vmatpush1.msra.mxu0 %v387
        %416 = vmatprep.subr.mxu0 0.0
        %417 = vmatpush1.msra.mxu0 %v388
        %418 = vmatprep.subr.mxu0 0.0
        %419 = vmatpush1.msra.mxu0 %v389
        %420 = vmatprep.subr.mxu0 0.0
        %421 = vmatpush1.msra.mxu0 %v390
        %422 = vmatprep.subr.mxu0 0.0
        %423 = vmatpush1.msra.mxu0 %v391
        %424 = vmatprep.subr.mxu0 0.0
        %425 = vmatpush1.msra.mxu0 0.0
        %426 = vmatprep.subr.mxu0 0.0
        %427 = vmatpush1.msra.mxu0 0.0
        %428 = vmatprep.subr.mxu0 0.0
        %429 = vmatpush1.msra.mxu0 0.0
        %430 = vmatprep.subr.mxu0 0.0
        %431 = vmatpush1.msra.mxu0 0.0
        %432 = vmatprep.subr.mxu0 0.0
        %433 = vmatpush1.msra.mxu0 0.0
        %434 = vmatprep.subr.mxu0 0.0
        %435 = vmatpush1.msra.mxu0 0.0
        %436 = vmatprep.subr.mxu0 0.0
        %437 = vmatpush1.msra.mxu0 0.0
        %438 = vmatprep.subr.mxu0 0.0
        %439 = vmatpush1.msra.mxu0 0.0
        %440 = vmatprep.subr.mxu0 0.0
        %441 = vmatpush1.msra.mxu0 0.0
        %442 = vmatprep.subr.mxu0 0.0
        %443 = vmatpush1.msra.mxu0 0.0
        %444 = vmatprep.subr.mxu0 0.0
        %445 = vmatpush1.msra.mxu0 0.0
        %446 = vmatprep.subr.mxu0 0.0
        %447 = vmatpush1.msra.mxu0 0.0
        %448 = vmatprep.subr.mxu0 0.0
        %449 = vmatpush1.msra.mxu0 0.0
        %450 = vmatprep.subr.mxu0 0.0
        %451 = vmatpush1.msra.mxu0 0.0
        %452 = vmatprep.subr.mxu0 0.0
        %453 = vmatpush1.msra.mxu0 0.0
        %454 = vmatprep.subr.mxu0 0.0
        %455 = vmatpush1.msra.mxu0 0.0
        %456 = vmatprep.mubr.f32.mxu0 0.0
        %457 = vmatmul.mubr.f32.gmra.mrb[0].mxu0 %v375
        %v458 = vpop.f32.mrb[0].mxu0
        %v459 = vadd.f32 0.0, %v458
        %v460 = vpop.f32.mrb[0].mxu0
        %461 = vdwg.mxu0
        %vm462 = vcmp.gt.f32.partialorder %v459, 0.0
        %v463 = vmul.f32 %v459, 0.2679492
        %v464 = vsel %vm462, %v459, %v463
        %v465 = vld [vmem:[#allocation9] sm:$0xff]
        %v466 = vld [vmem:[#allocation9 + $0x8] sm:$0xff]
        %v467 = vld [vmem:[#allocation9 + $0x10] sm:$0xff]
        %v468 = vld [vmem:[#allocation9 + $0x18] sm:$0xff]
        %v469 = vld [vmem:[#allocation9 + $0x20] sm:$0xff]
        %v470 = vld [vmem:[#allocation9 + $0x28] sm:$0xff]
        %v471 = vld [vmem:[#allocation9 + $0x30] sm:$0xff]
        %v472 = vld [vmem:[#allocation9 + $0x38] sm:$0xff]
        %v473 = vld [vmem:[#allocation9 + $0x40] sm:$0xff]
        %v474 = vld [vmem:[#allocation9 + $0x48] sm:$0xff]
        %v475 = vld [vmem:[#allocation9 + $0x50] sm:$0xff]
        %v476 = vld [vmem:[#allocation9 + $0x58] sm:$0xff]
        %v477 = vld [vmem:[#allocation9 + $0x60] sm:$0xff]
        %v478 = vld [vmem:[#allocation9 + $0x68] sm:$0xff]
        %v479 = vld [vmem:[#allocation9 + $0x70] sm:$0xff]
        %v480 = vld [vmem:[#allocation9 + $0x78] sm:$0xff]
        %481 = vmatprep.subr.mxu0 0.0
        %482 = vmatpush1.msra.mxu0 %v465
        %483 = vmatprep.subr.mxu0 0.0
        %484 = vmatpush1.msra.mxu0 %v466
        %485 = vmatprep.subr.mxu0 0.0
        %486 = vmatpush1.msra.mxu0 %v467
        %487 = vmatprep.subr.mxu0 0.0
        %488 = vmatpush1.msra.mxu0 %v468
        %489 = vmatprep.subr.mxu0 0.0
        %490 = vmatpush1.msra.mxu0 %v469
        %491 = vmatprep.subr.mxu0 0.0
        %492 = vmatpush1.msra.mxu0 %v470
        %493 = vmatprep.subr.mxu0 0.0
        %494 = vmatpush1.msra.mxu0 %v471
        %495 = vmatprep.subr.mxu0 0.0
        %496 = vmatpush1.msra.mxu0 %v472
        %497 = vmatprep.subr.mxu0 0.0
        %498 = vmatpush1.msra.mxu0 %v473
        %499 = vmatprep.subr.mxu0 0.0
        %500 = vmatpush1.msra.mxu0 %v474
        %501 = vmatprep.subr.mxu0 0.0
        %502 = vmatpush1.msra.mxu0 %v475
        %503 = vmatprep.subr.mxu0 0.0
        %504 = vmatpush1.msra.mxu0 %v476
        %505 = vmatprep.subr.mxu0 0.0
        %506 = vmatpush1.msra.mxu0 %v477
        %507 = vmatprep.subr.mxu0 0.0
        %508 = vmatpush1.msra.mxu0 %v478
        %509 = vmatprep.subr.mxu0 0.0
        %510 = vmatpush1.msra.mxu0 %v479
        %511 = vmatprep.subr.mxu0 0.0
        %512 = vmatpush1.msra.mxu0 %v480
        %513 = vmatprep.subr.mxu0 0.0
        %514 = vmatpush1.msra.mxu0 0.0
        %515 = vmatprep.subr.mxu0 0.0
        %516 = vmatpush1.msra.mxu0 0.0
        %517 = vmatprep.subr.mxu0 0.0
        %518 = vmatpush1.msra.mxu0 0.0
        %519 = vmatprep.subr.mxu0 0.0
        %520 = vmatpush1.msra.mxu0 0.0
        %521 = vmatprep.subr.mxu0 0.0
        %522 = vmatpush1.msra.mxu0 0.0
        %523 = vmatprep.subr.mxu0 0.0
        %524 = vmatpush1.msra.mxu0 0.0
        %525 = vmatprep.subr.mxu0 0.0
        %526 = vmatpush1.msra.mxu0 0.0
        %527 = vmatprep.subr.mxu0 0.0
        %528 = vmatpush1.msra.mxu0 0.0
        %529 = vmatprep.subr.mxu0 0.0
        %530 = vmatpush1.msra.mxu0 0.0
        %531 = vmatprep.subr.mxu0 0.0
        %532 = vmatpush1.msra.mxu0 0.0
        %533 = vmatprep.subr.mxu0 0.0
        %534 = vmatpush1.msra.mxu0 0.0
        %535 = vmatprep.subr.mxu0 0.0
        %536 = vmatpush1.msra.mxu0 0.0
        %537 = vmatprep.subr.mxu0 0.0
        %538 = vmatpush1.msra.mxu0 0.0
        %539 = vmatprep.subr.mxu0 0.0
        %540 = vmatpush1.msra.mxu0 0.0
        %541 = vmatprep.subr.mxu0 0.0
        %542 = vmatpush1.msra.mxu0 0.0
        %543 = vmatprep.subr.mxu0 0.0
        %544 = vmatpush1.msra.mxu0 0.0
        %545 = vmatprep.mubr.f32.mxu0 0.0
        %546 = vmatmul.mubr.f32.gmra.mrb[0].mxu0 %v464
        %v547 = vpop.f32.mrb[0].mxu0
        %v548 = vadd.f32 0.0, %v547
        %v549 = vpop.f32.mrb[0].mxu0
        %550 = vdwg.mxu0
        %v551 = vstv %s285
        %v552 = vmul.f32 %v548, %v551
        %553 = vst [vmem:[%s284] sm:$0xff] %v552
        %s554 = sand.u32 %s143, 1
        %s555 = scalar_lea.sflag [#allocation5], %s554
        %s556 = sand.u32 %s143, 1
        %s557 = smul.addr %s556, 8
        %s558 = scalar_lea.vmem [#allocation11], %s557
        // Predicated region
        $region57: #{tpu_custom_call.1} parent=39 // pred_check
          %p559 = pneg %p153
        $region58: #{tpu_custom_call.1} parent=39 // pred_check_branch
          %561 = sbr.rel (%p559) target = $region60
        $region59: #{tpu_custom_call.1} parent=39 // pred_region
          %s563 = ssub.s32 128, 128
          %564 = vsyncadd %s555, %s563
          %s565 = smul.addr %s25, 128
          %s566 = scalar_lea.hbm %s5, %s565
          %s568 = sshll.u32 %s558, 4
          %s569 = int_to_ptr.vmem [resolvable:$true] %s568
          %571 = dma.vmem_to_hbm [thread:$0]  %s569, 128, %s566, %s555
        $region60: #{tpu_custom_call.1} parent=39 // pred_fallthru
          _
      $region40: #{tpu_custom_call.1} parent=5 // pred_fallthru
        _
      %p572 = scmp.le.s32.totalorder 2, %s20
      // Predicated region
      $region61: #{tpu_custom_call.1} parent=5 // pred_check
        %p573 = pneg %p572
      $region62: #{tpu_custom_call.1} parent=5 // pred_check_branch
        %575 = sbr.rel (%p573) target = $region64
      $region63: #{tpu_custom_call.1} parent=5 // pred_region
        %s576 = ssub.s32 %s20, 2
        // Predicated region
        $region65: #{tpu_custom_call.1} parent=63 // pred_check
          %p577 = pneg %p159
        $region66: #{tpu_custom_call.1} parent=63 // pred_check_branch
          %579 = sbr.rel (%p577) target = $region68
        $region67: #{tpu_custom_call.1} parent=63 // pred_region
          %s580 = sand.u32 %s144, 1
          %s581 = scalar_lea.sflag [#allocation5], %s580
          %s582 = sand.u32 %s144, 1
          %s583 = smul.addr %s582, 8
          %s584 = scalar_lea.vmem [#allocation11], %s583
          %585 = dma.done %s581, 128
        $region68: #{tpu_custom_call.1} parent=63 // pred_fallthru
          _
      $region64: #{tpu_custom_call.1} parent=5 // pred_fallthru
        _
    $region6: #{tpu_custom_call.1} parent=1 // loop_footer
      %s24 = sadd.s32 1, %s20
    $region7: #{tpu_custom_call.1} parent=1 // loop_footer_branch
      %19 = sbr.rel target = $region3
    $region8: #{tpu_custom_call.1} parent=1 // loop_exit
      _
    %586 = vsyncpa [#allocation4], 1
    %s587 = scalar_lea.sflag [#allocation4], 1
    %588 = vsyncpa %s587, 1
    %589 = vsyncpa [#allocation7], 1
    %590 = vsyncpa [#allocation10], 1
    %591 = vsyncpa [#allocation5], 1
    %s592 = scalar_lea.sflag [#allocation5], 1
    %593 = vsyncpa %s592, 1

</llo_original>
